<compile_context>
chip_gen: v7x
topology: tpu7x:2x2x1
jax: 0.10.0
libtpu: 0.0.40
codegen_flags: <defaults>
</compile_context>

<pallas_src>
import functools

import jax
import jax.numpy as jnp
from jax.experimental import pallas as pl
from jax.experimental.pallas import tpu as pltpu


def _round_up(v, m):
    return ((v + m - 1) // m) * m


# ----------------------------------------------------------------------------
# Kernel 1: ConvTranspose2d(k=2, s=2) as a lane-dense pointwise matmul.
#   y[(ky*2+kx)*Cout + co, m] = sum_ci w[(ky*2+kx)*Cout+co, ci] * x[ci, m] + b[co]
# x: (Cin, Mpad) bf16, w: (4*Cout, Cin) bf16, b: (4*Cout, 1) f32 -> (4*Cout, Mpad) f32
# ----------------------------------------------------------------------------
def _upconv_matmul_kernel(x_ref, w_ref, b_ref, o_ref):
    acc = jnp.dot(w_ref[...], x_ref[...], preferred_element_type=jnp.float32)
    o_ref[...] = (acc + b_ref[...]).astype(o_ref.dtype)


def upconv_matmul(x_flat_bf16, w_bf16, b_f32, *, tm):
    r, cin = w_bf16.shape
    _, mpad = x_flat_bf16.shape
    assert mpad % tm == 0
    return pl.pallas_call(
        _upconv_matmul_kernel,
        out_shape=jax.ShapeDtypeStruct((r, mpad), jnp.float32),
        grid=(mpad // tm,),
        in_specs=[
            pl.BlockSpec((cin, tm), lambda j: (0, j)),   # spatial tiles on lanes
            pl.BlockSpec((r, cin), lambda j: (0, 0)),    # weights stay resident
            pl.BlockSpec((r, 1), lambda j: (0, 0)),
        ],
        out_specs=pl.BlockSpec((r, tm), lambda j: (0, j)),
        compiler_params=pltpu.CompilerParams(dimension_semantics=("parallel",)),
    )(x_flat_bf16, w_bf16, b_f32)


# ----------------------------------------------------------------------------
# Kernel 2: fused UNetConvBlock = conv3x3+ReLU -> conv3x3+ReLU (padding=1).
# Input is one image in "padded-flat" layout: channels on sublanes, flattened
# zero-padded spatial (Hp*Wp) on lanes, plus G = Wp+1 extra zero lanes on each
# side so the 9 tap shifts are plain static lane slices.
# ----------------------------------------------------------------------------
def _unet_conv_block_kernel(x_ref, m_ref, w1_ref, b1_ref, w2_ref, b2_ref,
                            o_ref, h_ref, *, wp, mp, g, c_mid):
    offs = [dy * wp + dx for dy in (-1, 0, 1) for dx in (-1, 0, 1)]

    # ---- conv1 (3x3, pad=1): 9 shifted bf16 dots, f32 accumulation -----------
    acc = jnp.zeros((c_mid, mp), jnp.float32)
    for t, off in enumerate(offs):
        xs = x_ref[:, g + off: g + off + mp].astype(jnp.bfloat16)   # (Cin, Mp)
        acc = acc + jnp.dot(w1_ref[t], xs, preferred_element_type=jnp.float32)
    # bias + ReLU in f32; mask zeroes the padding ring (conv2 expects zero pad)
    h1 = jnp.maximum(acc + b1_ref[...], 0.0) * m_ref[...]           # (Cmid, Mp)

    # stage the intermediate in a padded-flat VMEM scratch (no HBM round trip)
    h_ref[...] = jnp.zeros_like(h_ref)
    h_ref[:, g: g + mp] = h1

    # ---- conv2 (3x3, pad=1) + ReLU -------------------------------------------
    acc2 = jnp.zeros((c_mid, mp), jnp.float32)
    for t, off in enumerate(offs):
        hs = h_ref[:, g + off: g + off + mp].astype(jnp.bfloat16)   # (Cmid, Mp)
        acc2 = acc2 + jnp.dot(w2_ref[t], hs, preferred_element_type=jnp.float32)
    o_ref[...] = jnp.maximum(acc2 + b2_ref[...], 0.0).astype(o_ref.dtype)


def unet_conv_block(x_padflat, mask, w1, b1, w2, b2, *, wp, mp, g):
    n, c_in, l = x_padflat.shape
    c_mid = w1.shape[1]
    kernel = functools.partial(_unet_conv_block_kernel,
                               wp=wp, mp=mp, g=g, c_mid=c_mid)
    return pl.pallas_call(
        kernel,
        out_shape=jax.ShapeDtypeStruct((n, c_mid, mp), jnp.float32),
        grid=(n,),                                       # batch-parallel grid
        in_specs=[
            pl.BlockSpec((None, c_in, l), lambda i: (i, 0, 0)),
            pl.BlockSpec((1, mp), lambda i: (0, 0)),
            pl.BlockSpec((9, c_mid, c_in), lambda i: (0, 0, 0)),
            pl.BlockSpec((c_mid, 1), lambda i: (0, 0)),
            pl.BlockSpec((9, c_mid, c_mid), lambda i: (0, 0, 0)),
            pl.BlockSpec((c_mid, 1), lambda i: (0, 0)),
        ],
        out_specs=pl.BlockSpec((None, c_mid, mp), lambda i: (i, 0, 0)),
        scratch_shapes=[pltpu.VMEM((c_mid, l), jnp.float32)],
        compiler_params=pltpu.CompilerParams(dimension_semantics=("parallel",)),
    )(x_padflat, mask, w1, b1, w2, b2)


# ----------------------------------------------------------------------------
# Host-side layout glue (cheap, KB-scale) + forward pass
# ----------------------------------------------------------------------------
def conv_transpose2x2_s2(x_nchw, w_t, b_t):
    """PyTorch ConvTranspose2d(k=2, s=2). w_t: (Cin, Cout, 2, 2), b_t: (Cout,)."""
    n, cin, h, w = x_nchw.shape
    cout = w_t.shape[1]
    m = n * h * w
    tm = min(512, _round_up(m, 128))
    mpad = _round_up(m, tm)

    # (Cin, N*H*W): spatial on the lane axis -> lane-dense matmul output
    x_flat = jnp.transpose(x_nchw, (1, 0, 2, 3)).reshape(cin, m)
    x_flat = jnp.pad(x_flat, ((0, 0), (0, mpad - m))).astype(jnp.bfloat16)
    # rows ordered (ky, kx, co)
    w_mat = jnp.transpose(w_t, (2, 3, 1, 0)).reshape(4 * cout, cin).astype(jnp.bfloat16)
    b_mat = jnp.tile(b_t, 4).reshape(4 * cout, 1).astype(jnp.float32)

    y = upconv_matmul(x_flat, w_mat, b_mat, tm=tm)        # (4*Cout, Mpad) f32
    y = y[:, :m].reshape(2, 2, cout, n, h, w)             # (ky, kx, co, n, y, x)
    # pixel shuffle: up[n, co, 2y+ky, 2x+kx]
    up = jnp.transpose(y, (3, 2, 4, 0, 5, 1)).reshape(n, cout, 2 * h, 2 * w)
    return up


def unet_conv_block_forward(x_nchw, params):
    """UNetConvBlock (padding=True, batch_norm=False) on NCHW input."""
    n, c_in, h, w = x_nchw.shape
    hp, wp = h + 2, w + 2
    mp = hp * wp
    g = wp + 1
    # zero-pad spatially, flatten, add G zero lanes on each side for tap shifts
    xp = jnp.pad(x_nchw, ((0, 0), (0, 0), (1, 1), (1, 1)))
    x_flat = jnp.pad(xp.reshape(n, c_in, mp), ((0, 0), (0, 0), (g, g)))
    x_flat = x_flat.astype(jnp.float32)
    # interior mask (1 inside the image, 0 on the padding ring)
    mask = jnp.pad(jnp.ones((h, w), jnp.float32), ((1, 1), (1, 1))).reshape(1, mp)

    cout = params["conv1_w"].shape[0]
    # taps ordered ky*3+kx to match the kernel's (dy, dx) enumeration
    w1 = jnp.transpose(params["conv1_w"], (2, 3, 0, 1)).reshape(9, cout, c_in)
    w2 = jnp.transpose(params["conv2_w"], (2, 3, 0, 1)).reshape(9, cout, cout)
    w1 = w1.astype(jnp.bfloat16)
    w2 = w2.astype(jnp.bfloat16)
    b1 = params["conv1_b"].reshape(cout, 1).astype(jnp.float32)
    b2 = params["conv2_b"].reshape(cout, 1).astype(jnp.float32)

    out = unet_conv_block(x_flat, mask, w1, b1, w2, b2, wp=wp, mp=mp, g=g)
    # crop the padded-flat output back to (N, Cout, H, W)
    return out.reshape(n, cout, hp, wp)[:, :, 1:1 + h, 1:1 + w]


def unet_up_block_forward(x_nchw, bridge_nchw, params):
    x = x_nchw.astype(jnp.float32)
    bridge = bridge_nchw.astype(jnp.float32)

    # self.up = ConvTranspose2d(in_size, out_size, kernel_size=2, stride=2)
    up = conv_transpose2x2_s2(x, params["up_w"], params["up_b"])

    # center_crop(bridge, up.shape[2:]) then cat([up, crop], channel)
    th, tw = up.shape[2], up.shape[3]
    _, _, bh, bw = bridge.shape
    dy, dx = (bh - th) // 2, (bw - tw) // 2
    crop = bridge[:, :, dy:dy + th, dx:dx + tw]
    cat = jnp.concatenate([up, crop], axis=1)

    # self.conv_block = UNetConvBlock(in_size, out_size, padding=True, batch_norm=False)
    return unet_conv_block_forward(cat, params)


def init_params(key, in_size, out_size):
    ks = jax.random.split(key, 6)
    scale = 0.1
    return {
        # nn.ConvTranspose2d(in_size, out_size, kernel_size=2, stride=2)
        "up_w": scale * jax.random.normal(ks[0], (in_size, out_size, 2, 2), jnp.float32),
        "up_b": scale * jax.random.normal(ks[1], (out_size,), jnp.float32),
        # nn.Conv2d(in_size, out_size, 3, padding=1)
        "conv1_w": scale * jax.random.normal(ks[2], (out_size, in_size, 3, 3), jnp.float32),
        "conv1_b": scale * jax.random.normal(ks[3], (out_size,), jnp.float32),
        # nn.Conv2d(out_size, out_size, 3, padding=1)
        "conv2_w": scale * jax.random.normal(ks[4], (out_size, out_size, 3, 3), jnp.float32),
        "conv2_b": scale * jax.random.normal(ks[5], (out_size,), jnp.float32),
    }


if __name__ == "__main__":
    key = jax.random.PRNGKey(0)
    k_x, k_b, k_p = jax.random.split(key, 3)

    in_size, out_size = 8, 4
    batch = 2
    # x: decoder feature map; bridge: skip connection (channels = in_size - out_size)
    x = jax.random.normal(k_x, (batch, in_size, 8, 8), jnp.float32)                  # up -> (2,4,16,16)
    bridge = jax.random.normal(k_b, (batch, in_size - out_size, 20, 20), jnp.float32)  # crop -> (2,4,16,16)

    params = init_params(k_p, in_size, out_size)

    fwd = jax.jit(unet_up_block_forward)
    out = jax.block_until_ready(fwd(x, bridge, params))

    assert out.shape == (batch, out_size, 16, 16), out.shape
    assert out.dtype == jnp.float32
    print("KERNEL_OK")
</pallas_src>

<mosaic_0001>
module attributes {stable_mosaic.version = 11 : i64} {
  func.func @_upconv_matmul_kernel(%arg0: i32, %arg1: memref<8x128xbf16, #tpu.memory_space<vmem>>, %arg2: memref<16x8xbf16, #tpu.memory_space<vmem>>, %arg3: memref<16x1xf32, #tpu.memory_space<vmem>>, %arg4: memref<16x128xf32, #tpu.memory_space<vmem>>) attributes {dimension_semantics = [#tpu.dimension_semantics<parallel>], iteration_bounds = array<i64: 1>, scalar_prefetch = 0 : i64, scratch_operands = 0 : i64, tpu.core_type = #tpu.core_type<tc>, window_params = [{transform_indices = @transform_0, window_bounds = array<i64: 8, 128>}, {pipeline_mode = #tpu.pipeline_mode<synchronous>, transform_indices = @transform_1, window_bounds = array<i64: 16, 8>}, {pipeline_mode = #tpu.pipeline_mode<synchronous>, transform_indices = @transform_2, window_bounds = array<i64: 16, 1>}, {transform_indices = @transform_3, window_bounds = array<i64: 16, 128>}]} {
    %c0 = arith.constant 0 : index
    %c0_0 = arith.constant 0 : index
    %0 = vector.load %arg2[%c0, %c0_0] : memref<16x8xbf16, #tpu.memory_space<vmem>>, vector<16x8xbf16>
    %c0_1 = arith.constant 0 : index
    %c0_2 = arith.constant 0 : index
    %1 = vector.load %arg1[%c0_1, %c0_2] : memref<8x128xbf16, #tpu.memory_space<vmem>>, vector<8x128xbf16>
    %cst = arith.constant dense<0.000000e+00> : vector<16x128xf32>
    %2 = tpu.matmul %0, %1, %cst {dimension_numbers = #tpu.dot_dimension_numbers<[1], [0], [0], [1], [0, 0, 1, 1], [], []>} : vector<16x8xbf16>, vector<8x128xbf16>, vector<16x128xf32> -> vector<16x128xf32>
    %c0_3 = arith.constant 0 : index
    %c0_4 = arith.constant 0 : index
    %3 = vector.load %arg3[%c0_3, %c0_4] : memref<16x1xf32, #tpu.memory_space<vmem>>, vector<16x1xf32>
    %4 = vector.broadcast %3 : vector<16x1xf32> to vector<16x128xf32>
    %5 = arith.addf %2, %4 : vector<16x128xf32>
    %c0_5 = arith.constant 0 : index
    %c0_6 = arith.constant 0 : index
    %6 = vector.load %arg4[%c0_5, %c0_6] : memref<16x128xf32, #tpu.memory_space<vmem>>, vector<16x128xf32>
    tpu.vector_store %arg4[%c0_5, %c0_6], %5 {strides = array<i32>} : memref<16x128xf32, #tpu.memory_space<vmem>>, vector<16x128xf32>,
    return
  }
  func.func @transform_0(%arg0: i32) -> (i32, i32) {
    %c0_i32 = arith.constant 0 : i32
    %c0_i32_0 = arith.constant 0 : i32
    return %c0_i32, %arg0 : i32, i32
  }
  func.func @transform_1(%arg0: i32) -> (i32, i32) {
    %c0_i32 = arith.constant 0 : i32
    %c0_i32_0 = arith.constant 0 : i32
    %c0_i32_1 = arith.constant 0 : i32
    return %c0_i32, %c0_i32_0 : i32, i32
  }
  func.func @transform_2(%arg0: i32) -> (i32, i32) {
    %c0_i32 = arith.constant 0 : i32
    %c0_i32_0 = arith.constant 0 : i32
    %c0_i32_1 = arith.constant 0 : i32
    return %c0_i32, %c0_i32_0 : i32, i32
  }
  func.func @transform_3(%arg0: i32) -> (i32, i32) {
    %c0_i32 = arith.constant 0 : i32
    %c0_i32_0 = arith.constant 0 : i32
    return %c0_i32, %arg0 : i32, i32
  }
}

module attributes {stable_mosaic.version = 11 : i64} {
  func.func @_unet_conv_block_kernel(%arg0: i32, %arg1: memref<1x8x362xf32, #tpu.memory_space<vmem>>, %arg2: memref<1x324xf32, #tpu.memory_space<vmem>>, %arg3: memref<9x4x8xbf16, #tpu.memory_space<vmem>>, %arg4: memref<4x1xf32, #tpu.memory_space<vmem>>, %arg5: memref<9x4x4xbf16, #tpu.memory_space<vmem>>, %arg6: memref<4x1xf32, #tpu.memory_space<vmem>>, %arg7: memref<1x4x324xf32, #tpu.memory_space<vmem>>, %arg8: memref<4x362xf32, #tpu.memory_space<vmem>>) attributes {dimension_semantics = [#tpu.dimension_semantics<parallel>], iteration_bounds = array<i64: 2>, scalar_prefetch = 0 : i64, scratch_operands = 1 : i64, tpu.core_type = #tpu.core_type<tc>, window_params = [{transform_indices = @transform_0, window_bounds = array<i64: 1, 8, 362>}, {pipeline_mode = #tpu.pipeline_mode<synchronous>, transform_indices = @transform_1, window_bounds = array<i64: 1, 324>}, {pipeline_mode = #tpu.pipeline_mode<synchronous>, transform_indices = @transform_2, window_bounds = array<i64: 9, 4, 8>}, {pipeline_mode = #tpu.pipeline_mode<synchronous>, transform_indices = @transform_3, window_bounds = array<i64: 4, 1>}, {pipeline_mode = #tpu.pipeline_mode<synchronous>, transform_indices = @transform_4, window_bounds = array<i64: 9, 4, 4>}, {pipeline_mode = #tpu.pipeline_mode<synchronous>, transform_indices = @transform_5, window_bounds = array<i64: 4, 1>}, {transform_indices = @transform_6, window_bounds = array<i64: 1, 4, 324>}]} {
    %cst = arith.constant 0.000000e+00 : f32
    %0 = vector.broadcast %cst : f32 to vector<4x324xf32>
    %c0 = arith.constant 0 : index
    %c0_0 = arith.constant 0 : index
    %c0_1 = arith.constant 0 : index
    %1 = vector.load %arg1[%c0, %c0_0, %c0_1] : memref<1x8x362xf32, #tpu.memory_space<vmem>>, vector<1x8x324xf32>
    %2 = vector.shape_cast %1 : vector<1x8x324xf32> to vector<8x324xf32>
    %3 = arith.truncf %2 : vector<8x324xf32> to vector<8x324xbf16>
    %c0_2 = arith.constant 0 : index
    %c0_3 = arith.constant 0 : index
    %c0_4 = arith.constant 0 : index
    %4 = vector.load %arg3[%c0_2, %c0_3, %c0_4] : memref<9x4x8xbf16, #tpu.memory_space<vmem>>, vector<1x4x8xbf16>
    %5 = vector.shape_cast %4 : vector<1x4x8xbf16> to vector<4x8xbf16>
    %cst_5 = arith.constant dense<0.000000e+00> : vector<4x324xf32>
    %6 = tpu.matmul %5, %3, %cst_5 {dimension_numbers = #tpu.dot_dimension_numbers<[1], [0], [0], [1], [0, 0, 1, 1], [], []>} : vector<4x8xbf16>, vector<8x324xbf16>, vector<4x324xf32> -> vector<4x324xf32>
    %7 = arith.addf %0, %6 : vector<4x324xf32>
    %c0_6 = arith.constant 0 : index
    %c0_7 = arith.constant 0 : index
    %c1 = arith.constant 1 : index
    %8 = vector.load %arg1[%c0_6, %c0_7, %c1] : memref<1x8x362xf32, #tpu.memory_space<vmem>>, vector<1x8x324xf32>
    %9 = vector.shape_cast %8 : vector<1x8x324xf32> to vector<8x324xf32>
    %10 = arith.truncf %9 : vector<8x324xf32> to vector<8x324xbf16>
    %c1_8 = arith.constant 1 : index
    %c0_9 = arith.constant 0 : index
    %c0_10 = arith.constant 0 : index
    %11 = vector.load %arg3[%c1_8, %c0_9, %c0_10] : memref<9x4x8xbf16, #tpu.memory_space<vmem>>, vector<1x4x8xbf16>
    %12 = vector.shape_cast %11 : vector<1x4x8xbf16> to vector<4x8xbf16>
    %cst_11 = arith.constant dense<0.000000e+00> : vector<4x324xf32>
    %13 = tpu.matmul %12, %10, %cst_11 {dimension_numbers = #tpu.dot_dimension_numbers<[1], [0], [0], [1], [0, 0, 1, 1], [], []>} : vector<4x8xbf16>, vector<8x324xbf16>, vector<4x324xf32> -> vector<4x324xf32>
    %14 = arith.addf %7, %13 : vector<4x324xf32>
    %c0_12 = arith.constant 0 : index
    %c0_13 = arith.constant 0 : index
    %c2 = arith.constant 2 : index
    %15 = vector.load %arg1[%c0_12, %c0_13, %c2] : memref<1x8x362xf32, #tpu.memory_space<vmem>>, vector<1x8x324xf32>
    %16 = vector.shape_cast %15 : vector<1x8x324xf32> to vector<8x324xf32>
    %17 = arith.truncf %16 : vector<8x324xf32> to vector<8x324xbf16>
    %c2_14 = arith.constant 2 : index
    %c0_15 = arith.constant 0 : index
    %c0_16 = arith.constant 0 : index
    %18 = vector.load %arg3[%c2_14, %c0_15, %c0_16] : memref<9x4x8xbf16, #tpu.memory_space<vmem>>, vector<1x4x8xbf16>
    %19 = vector.shape_cast %18 : vector<1x4x8xbf16> to vector<4x8xbf16>
    %cst_17 = arith.constant dense<0.000000e+00> : vector<4x324xf32>
    %20 = tpu.matmul %19, %17, %cst_17 {dimension_numbers = #tpu.dot_dimension_numbers<[1], [0], [0], [1], [0, 0, 1, 1], [], []>} : vector<4x8xbf16>, vector<8x324xbf16>, vector<4x324xf32> -> vector<4x324xf32>
    %21 = arith.addf %14, %20 : vector<4x324xf32>
    %c0_18 = arith.constant 0 : index
    %c0_19 = arith.constant 0 : index
    %c18 = arith.constant 18 : index
    %22 = vector.load %arg1[%c0_18, %c0_19, %c18] : memref<1x8x362xf32, #tpu.memory_space<vmem>>, vector<1x8x324xf32>
    %23 = vector.shape_cast %22 : vector<1x8x324xf32> to vector<8x324xf32>
    %24 = arith.truncf %23 : vector<8x324xf32> to vector<8x324xbf16>
    %c3 = arith.constant 3 : index
    %c0_20 = arith.constant 0 : index
    %c0_21 = arith.constant 0 : index
    %25 = vector.load %arg3[%c3, %c0_20, %c0_21] : memref<9x4x8xbf16, #tpu.memory_space<vmem>>, vector<1x4x8xbf16>
    %26 = vector.shape_cast %25 : vector<1x4x8xbf16> to vector<4x8xbf16>
    %cst_22 = arith.constant dense<0.000000e+00> : vector<4x324xf32>
    %27 = tpu.matmul %26, %24, %cst_22 {dimension_numbers = #tpu.dot_dimension_numbers<[1], [0], [0], [1], [0, 0, 1, 1], [], []>} : vector<4x8xbf16>, vector<8x324xbf16>, vector<4x324xf32> -> vector<4x324xf32>
    %28 = arith.addf %21, %27 : vector<4x324xf32>
    %c0_23 = arith.constant 0 : index
    %c0_24 = arith.constant 0 : index
    %c19 = arith.constant 19 : index
    %29 = vector.load %arg1[%c0_23, %c0_24, %c19] : memref<1x8x362xf32, #tpu.memory_space<vmem>>, vector<1x8x324xf32>
    %30 = vector.shape_cast %29 : vector<1x8x324xf32> to vector<8x324xf32>
    %31 = arith.truncf %30 : vector<8x324xf32> to vector<8x324xbf16>
    %c4 = arith.constant 4 : index
    %c0_25 = arith.constant 0 : index
    %c0_26 = arith.constant 0 : index
    %32 = vector.load %arg3[%c4, %c0_25, %c0_26] : memref<9x4x8xbf16, #tpu.memory_space<vmem>>, vector<1x4x8xbf16>
    %33 = vector.shape_cast %32 : vector<1x4x8xbf16> to vector<4x8xbf16>
    %cst_27 = arith.constant dense<0.000000e+00> : vector<4x324xf32>
    %34 = tpu.matmul %33, %31, %cst_27 {dimension_numbers = #tpu.dot_dimension_numbers<[1], [0], [0], [1], [0, 0, 1, 1], [], []>} : vector<4x8xbf16>, vector<8x324xbf16>, vector<4x324xf32> -> vector<4x324xf32>
    %35 = arith.addf %28, %34 : vector<4x324xf32>
    %c0_28 = arith.constant 0 : index
    %c0_29 = arith.constant 0 : index
    %c20 = arith.constant 20 : index
    %36 = vector.load %arg1[%c0_28, %c0_29, %c20] : memref<1x8x362xf32, #tpu.memory_space<vmem>>, vector<1x8x324xf32>
    %37 = vector.shape_cast %36 : vector<1x8x324xf32> to vector<8x324xf32>
    %38 = arith.truncf %37 : vector<8x324xf32> to vector<8x324xbf16>
    %c5 = arith.constant 5 : index
    %c0_30 = arith.constant 0 : index
    %c0_31 = arith.constant 0 : index
    %39 = vector.load %arg3[%c5, %c0_30, %c0_31] : memref<9x4x8xbf16, #tpu.memory_space<vmem>>, vector<1x4x8xbf16>
    %40 = vector.shape_cast %39 : vector<1x4x8xbf16> to vector<4x8xbf16>
    %cst_32 = arith.constant dense<0.000000e+00> : vector<4x324xf32>
    %41 = tpu.matmul %40, %38, %cst_32 {dimension_numbers = #tpu.dot_dimension_numbers<[1], [0], [0], [1], [0, 0, 1, 1], [], []>} : vector<4x8xbf16>, vector<8x324xbf16>, vector<4x324xf32> -> vector<4x324xf32>
    %42 = arith.addf %35, %41 : vector<4x324xf32>
    %c0_33 = arith.constant 0 : index
    %c0_34 = arith.constant 0 : index
    %c36 = arith.constant 36 : index
    %43 = vector.load %arg1[%c0_33, %c0_34, %c36] : memref<1x8x362xf32, #tpu.memory_space<vmem>>, vector<1x8x324xf32>
    %44 = vector.shape_cast %43 : vector<1x8x324xf32> to vector<8x324xf32>
    %45 = arith.truncf %44 : vector<8x324xf32> to vector<8x324xbf16>
    %c6 = arith.constant 6 : index
    %c0_35 = arith.constant 0 : index
    %c0_36 = arith.constant 0 : index
    %46 = vector.load %arg3[%c6, %c0_35, %c0_36] : memref<9x4x8xbf16, #tpu.memory_space<vmem>>, vector<1x4x8xbf16>
    %47 = vector.shape_cast %46 : vector<1x4x8xbf16> to vector<4x8xbf16>
    %cst_37 = arith.constant dense<0.000000e+00> : vector<4x324xf32>
    %48 = tpu.matmul %47, %45, %cst_37 {dimension_numbers = #tpu.dot_dimension_numbers<[1], [0], [0], [1], [0, 0, 1, 1], [], []>} : vector<4x8xbf16>, vector<8x324xbf16>, vector<4x324xf32> -> vector<4x324xf32>
    %49 = arith.addf %42, %48 : vector<4x324xf32>
    %c0_38 = arith.constant 0 : index
    %c0_39 = arith.constant 0 : index
    %c37 = arith.constant 37 : index
    %50 = vector.load %arg1[%c0_38, %c0_39, %c37] : memref<1x8x362xf32, #tpu.memory_space<vmem>>, vector<1x8x324xf32>
    %51 = vector.shape_cast %50 : vector<1x8x324xf32> to vector<8x324xf32>
    %52 = arith.truncf %51 : vector<8x324xf32> to vector<8x324xbf16>
    %c7 = arith.constant 7 : index
    %c0_40 = arith.constant 0 : index
    %c0_41 = arith.constant 0 : index
    %53 = vector.load %arg3[%c7, %c0_40, %c0_41] : memref<9x4x8xbf16, #tpu.memory_space<vmem>>, vector<1x4x8xbf16>
    %54 = vector.shape_cast %53 : vector<1x4x8xbf16> to vector<4x8xbf16>
    %cst_42 = arith.constant dense<0.000000e+00> : vector<4x324xf32>
    %55 = tpu.matmul %54, %52, %cst_42 {dimension_numbers = #tpu.dot_dimension_numbers<[1], [0], [0], [1], [0, 0, 1, 1], [], []>} : vector<4x8xbf16>, vector<8x324xbf16>, vector<4x324xf32> -> vector<4x324xf32>
    %56 = arith.addf %49, %55 : vector<4x324xf32>
    %c0_43 = arith.constant 0 : index
    %c0_44 = arith.constant 0 : index
    %c38 = arith.constant 38 : index
    %57 = vector.load %arg1[%c0_43, %c0_44, %c38] : memref<1x8x362xf32, #tpu.memory_space<vmem>>, vector<1x8x324xf32>
    %58 = vector.shape_cast %57 : vector<1x8x324xf32> to vector<8x324xf32>
    %59 = arith.truncf %58 : vector<8x324xf32> to vector<8x324xbf16>
    %c8 = arith.constant 8 : index
    %c0_45 = arith.constant 0 : index
    %c0_46 = arith.constant 0 : index
    %60 = vector.load %arg3[%c8, %c0_45, %c0_46] : memref<9x4x8xbf16, #tpu.memory_space<vmem>>, vector<1x4x8xbf16>
    %61 = vector.shape_cast %60 : vector<1x4x8xbf16> to vector<4x8xbf16>
    %cst_47 = arith.constant dense<0.000000e+00> : vector<4x324xf32>
    %62 = tpu.matmul %61, %59, %cst_47 {dimension_numbers = #tpu.dot_dimension_numbers<[1], [0], [0], [1], [0, 0, 1, 1], [], []>} : vector<4x8xbf16>, vector<8x324xbf16>, vector<4x324xf32> -> vector<4x324xf32>
    %63 = arith.addf %56, %62 : vector<4x324xf32>
    %c0_48 = arith.constant 0 : index
    %c0_49 = arith.constant 0 : index
    %64 = vector.load %arg4[%c0_48, %c0_49] : memref<4x1xf32, #tpu.memory_space<vmem>>, vector<4x1xf32>
    %65 = vector.broadcast %64 : vector<4x1xf32> to vector<4x324xf32>
    %66 = arith.addf %63, %65 : vector<4x324xf32>
    %cst_50 = arith.constant 0.000000e+00 : f32
    %67 = vector.broadcast %cst_50 : f32 to vector<4x324xf32>
    %68 = arith.maximumf %66, %67 : vector<4x324xf32>
    %c0_51 = arith.constant 0 : index
    %c0_52 = arith.constant 0 : index
    %69 = vector.load %arg2[%c0_51, %c0_52] : memref<1x324xf32, #tpu.memory_space<vmem>>, vector<1x324xf32>
    %70 = vector.broadcast %69 : vector<1x324xf32> to vector<4x324xf32>
    %71 = arith.mulf %68, %70 : vector<4x324xf32>
    %cst_53 = arith.constant 0.000000e+00 : f32
    %72 = vector.broadcast %cst_53 : f32 to vector<4x362xf32>
    %c0_54 = arith.constant 0 : index
    %c0_55 = arith.constant 0 : index
    %73 = vector.load %arg8[%c0_54, %c0_55] : memref<4x362xf32, #tpu.memory_space<vmem>>, vector<4x362xf32>
    tpu.vector_store %arg8[%c0_54, %c0_55], %72 {strides = array<i32>} : memref<4x362xf32, #tpu.memory_space<vmem>>, vector<4x362xf32>,
    %c0_56 = arith.constant 0 : index
    %c19_57 = arith.constant 19 : index
    %74 = vector.load %arg8[%c0_56, %c19_57] : memref<4x362xf32, #tpu.memory_space<vmem>>, vector<4x324xf32>
    tpu.vector_store %arg8[%c0_56, %c19_57], %71 {strides = array<i32>} : memref<4x362xf32, #tpu.memory_space<vmem>>, vector<4x324xf32>,
    %cst_58 = arith.constant 0.000000e+00 : f32
    %75 = vector.broadcast %cst_58 : f32 to vector<4x324xf32>
    %c0_59 = arith.constant 0 : index
    %c0_60 = arith.constant 0 : index
    %76 = vector.load %arg8[%c0_59, %c0_60] : memref<4x362xf32, #tpu.memory_space<vmem>>, vector<4x324xf32>
    %77 = arith.truncf %76 : vector<4x324xf32> to vector<4x324xbf16>
    %c0_61 = arith.constant 0 : index
    %c0_62 = arith.constant 0 : index
    %c0_63 = arith.constant 0 : index
    %78 = vector.load %arg5[%c0_61, %c0_62, %c0_63] : memref<9x4x4xbf16, #tpu.memory_space<vmem>>, vector<1x4x4xbf16>
    %79 = vector.shape_cast %78 : vector<1x4x4xbf16> to vector<4x4xbf16>
    %cst_64 = arith.constant dense<0.000000e+00> : vector<4x324xf32>
    %80 = tpu.matmul %79, %77, %cst_64 {dimension_numbers = #tpu.dot_dimension_numbers<[1], [0], [0], [1], [0, 0, 1, 1], [], []>} : vector<4x4xbf16>, vector<4x324xbf16>, vector<4x324xf32> -> vector<4x324xf32>
    %81 = arith.addf %75, %80 : vector<4x324xf32>
    %c0_65 = arith.constant 0 : index
    %c1_66 = arith.constant 1 : index
    %82 = vector.load %arg8[%c0_65, %c1_66] : memref<4x362xf32, #tpu.memory_space<vmem>>, vector<4x324xf32>
    %83 = arith.truncf %82 : vector<4x324xf32> to vector<4x324xbf16>
    %c1_67 = arith.constant 1 : index
    %c0_68 = arith.constant 0 : index
    %c0_69 = arith.constant 0 : index
    %84 = vector.load %arg5[%c1_67, %c0_68, %c0_69] : memref<9x4x4xbf16, #tpu.memory_space<vmem>>, vector<1x4x4xbf16>
    %85 = vector.shape_cast %84 : vector<1x4x4xbf16> to vector<4x4xbf16>
    %cst_70 = arith.constant dense<0.000000e+00> : vector<4x324xf32>
    %86 = tpu.matmul %85, %83, %cst_70 {dimension_numbers = #tpu.dot_dimension_numbers<[1], [0], [0], [1], [0, 0, 1, 1], [], []>} : vector<4x4xbf16>, vector<4x324xbf16>, vector<4x324xf32> -> vector<4x324xf32>
    %87 = arith.addf %81, %86 : vector<4x324xf32>
    %c0_71 = arith.constant 0 : index
    %c2_72 = arith.constant 2 : index
    %88 = vector.load %arg8[%c0_71, %c2_72] : memref<4x362xf32, #tpu.memory_space<vmem>>, vector<4x324xf32>
    %89 = arith.truncf %88 : vector<4x324xf32> to vector<4x324xbf16>
    %c2_73 = arith.constant 2 : index
    %c0_74 = arith.constant 0 : index
    %c0_75 = arith.constant 0 : index
    %90 = vector.load %arg5[%c2_73, %c0_74, %c0_75] : memref<9x4x4xbf16, #tpu.memory_space<vmem>>, vector<1x4x4xbf16>
    %91 = vector.shape_cast %90 : vector<1x4x4xbf16> to vector<4x4xbf16>
    %cst_76 = arith.constant dense<0.000000e+00> : vector<4x324xf32>
    %92 = tpu.matmul %91, %89, %cst_76 {dimension_numbers = #tpu.dot_dimension_numbers<[1], [0], [0], [1], [0, 0, 1, 1], [], []>} : vector<4x4xbf16>, vector<4x324xbf16>, vector<4x324xf32> -> vector<4x324xf32>
    %93 = arith.addf %87, %92 : vector<4x324xf32>
    %c0_77 = arith.constant 0 : index
    %c18_78 = arith.constant 18 : index
    %94 = vector.load %arg8[%c0_77, %c18_78] : memref<4x362xf32, #tpu.memory_space<vmem>>, vector<4x324xf32>
    %95 = arith.truncf %94 : vector<4x324xf32> to vector<4x324xbf16>
    %c3_79 = arith.constant 3 : index
    %c0_80 = arith.constant 0 : index
    %c0_81 = arith.constant 0 : index
    %96 = vector.load %arg5[%c3_79, %c0_80, %c0_81] : memref<9x4x4xbf16, #tpu.memory_space<vmem>>, vector<1x4x4xbf16>
    %97 = vector.shape_cast %96 : vector<1x4x4xbf16> to vector<4x4xbf16>
    %cst_82 = arith.constant dense<0.000000e+00> : vector<4x324xf32>
    %98 = tpu.matmul %97, %95, %cst_82 {dimension_numbers = #tpu.dot_dimension_numbers<[1], [0], [0], [1], [0, 0, 1, 1], [], []>} : vector<4x4xbf16>, vector<4x324xbf16>, vector<4x324xf32> -> vector<4x324xf32>
    %99 = arith.addf %93, %98 : vector<4x324xf32>
    %c0_83 = arith.constant 0 : index
    %c19_84 = arith.constant 19 : index
    %100 = vector.load %arg8[%c0_83, %c19_84] : memref<4x362xf32, #tpu.memory_space<vmem>>, vector<4x324xf32>
    %101 = arith.truncf %100 : vector<4x324xf32> to vector<4x324xbf16>
    %c4_85 = arith.constant 4 : index
    %c0_86 = arith.constant 0 : index
    %c0_87 = arith.constant 0 : index
    %102 = vector.load %arg5[%c4_85, %c0_86, %c0_87] : memref<9x4x4xbf16, #tpu.memory_space<vmem>>, vector<1x4x4xbf16>
    %103 = vector.shape_cast %102 : vector<1x4x4xbf16> to vector<4x4xbf16>
    %cst_88 = arith.constant dense<0.000000e+00> : vector<4x324xf32>
    %104 = tpu.matmul %103, %101, %cst_88 {dimension_numbers = #tpu.dot_dimension_numbers<[1], [0], [0], [1], [0, 0, 1, 1], [], []>} : vector<4x4xbf16>, vector<4x324xbf16>, vector<4x324xf32> -> vector<4x324xf32>
    %105 = arith.addf %99, %104 : vector<4x324xf32>
    %c0_89 = arith.constant 0 : index
    %c20_90 = arith.constant 20 : index
    %106 = vector.load %arg8[%c0_89, %c20_90] : memref<4x362xf32, #tpu.memory_space<vmem>>, vector<4x324xf32>
    %107 = arith.truncf %106 : vector<4x324xf32> to vector<4x324xbf16>
    %c5_91 = arith.constant 5 : index
    %c0_92 = arith.constant 0 : index
    %c0_93 = arith.constant 0 : index
    %108 = vector.load %arg5[%c5_91, %c0_92, %c0_93] : memref<9x4x4xbf16, #tpu.memory_space<vmem>>, vector<1x4x4xbf16>
    %109 = vector.shape_cast %108 : vector<1x4x4xbf16> to vector<4x4xbf16>
    %cst_94 = arith.constant dense<0.000000e+00> : vector<4x324xf32>
    %110 = tpu.matmul %109, %107, %cst_94 {dimension_numbers = #tpu.dot_dimension_numbers<[1], [0], [0], [1], [0, 0, 1, 1], [], []>} : vector<4x4xbf16>, vector<4x324xbf16>, vector<4x324xf32> -> vector<4x324xf32>
    %111 = arith.addf %105, %110 : vector<4x324xf32>
    %c0_95 = arith.constant 0 : index
    %c36_96 = arith.constant 36 : index
    %112 = vector.load %arg8[%c0_95, %c36_96] : memref<4x362xf32, #tpu.memory_space<vmem>>, vector<4x324xf32>
    %113 = arith.truncf %112 : vector<4x324xf32> to vector<4x324xbf16>
    %c6_97 = arith.constant 6 : index
    %c0_98 = arith.constant 0 : index
    %c0_99 = arith.constant 0 : index
    %114 = vector.load %arg5[%c6_97, %c0_98, %c0_99] : memref<9x4x4xbf16, #tpu.memory_space<vmem>>, vector<1x4x4xbf16>
    %115 = vector.shape_cast %114 : vector<1x4x4xbf16> to vector<4x4xbf16>
    %cst_100 = arith.constant dense<0.000000e+00> : vector<4x324xf32>
    %116 = tpu.matmul %115, %113, %cst_100 {dimension_numbers = #tpu.dot_dimension_numbers<[1], [0], [0], [1], [0, 0, 1, 1], [], []>} : vector<4x4xbf16>, vector<4x324xbf16>, vector<4x324xf32> -> vector<4x324xf32>
    %117 = arith.addf %111, %116 : vector<4x324xf32>
    %c0_101 = arith.constant 0 : index
    %c37_102 = arith.constant 37 : index
    %118 = vector.load %arg8[%c0_101, %c37_102] : memref<4x362xf32, #tpu.memory_space<vmem>>, vector<4x324xf32>
    %119 = arith.truncf %118 : vector<4x324xf32> to vector<4x324xbf16>
    %c7_103 = arith.constant 7 : index
    %c0_104 = arith.constant 0 : index
    %c0_105 = arith.constant 0 : index
    %120 = vector.load %arg5[%c7_103, %c0_104, %c0_105] : memref<9x4x4xbf16, #tpu.memory_space<vmem>>, vector<1x4x4xbf16>
    %121 = vector.shape_cast %120 : vector<1x4x4xbf16> to vector<4x4xbf16>
    %cst_106 = arith.constant dense<0.000000e+00> : vector<4x324xf32>
    %122 = tpu.matmul %121, %119, %cst_106 {dimension_numbers = #tpu.dot_dimension_numbers<[1], [0], [0], [1], [0, 0, 1, 1], [], []>} : vector<4x4xbf16>, vector<4x324xbf16>, vector<4x324xf32> -> vector<4x324xf32>
    %123 = arith.addf %117, %122 : vector<4x324xf32>
    %c0_107 = arith.constant 0 : index
    %c38_108 = arith.constant 38 : index
    %124 = vector.load %arg8[%c0_107, %c38_108] : memref<4x362xf32, #tpu.memory_space<vmem>>, vector<4x324xf32>
    %125 = arith.truncf %124 : vector<4x324xf32> to vector<4x324xbf16>
    %c8_109 = arith.constant 8 : index
    %c0_110 = arith.constant 0 : index
    %c0_111 = arith.constant 0 : index
    %126 = vector.load %arg5[%c8_109, %c0_110, %c0_111] : memref<9x4x4xbf16, #tpu.memory_space<vmem>>, vector<1x4x4xbf16>
    %127 = vector.shape_cast %126 : vector<1x4x4xbf16> to vector<4x4xbf16>
    %cst_112 = arith.constant dense<0.000000e+00> : vector<4x324xf32>
    %128 = tpu.matmul %127, %125, %cst_112 {dimension_numbers = #tpu.dot_dimension_numbers<[1], [0], [0], [1], [0, 0, 1, 1], [], []>} : vector<4x4xbf16>, vector<4x324xbf16>, vector<4x324xf32> -> vector<4x324xf32>
    %129 = arith.addf %123, %128 : vector<4x324xf32>
    %c0_113 = arith.constant 0 : index
    %c0_114 = arith.constant 0 : index
    %130 = vector.load %arg6[%c0_113, %c0_114] : memref<4x1xf32, #tpu.memory_space<vmem>>, vector<4x1xf32>
    %131 = vector.broadcast %130 : vector<4x1xf32> to vector<4x324xf32>
    %132 = arith.addf %129, %131 : vector<4x324xf32>
    %cst_115 = arith.constant 0.000000e+00 : f32
    %133 = vector.broadcast %cst_115 : f32 to vector<4x324xf32>
    %134 = arith.maximumf %132, %133 : vector<4x324xf32>
    %c0_116 = arith.constant 0 : index
    %c0_117 = arith.constant 0 : index
    %c0_118 = arith.constant 0 : index
    %135 = vector.load %arg7[%c0_116, %c0_117, %c0_118] : memref<1x4x324xf32, #tpu.memory_space<vmem>>, vector<1x4x324xf32>
    %136 = vector.shape_cast %135 : vector<1x4x324xf32> to vector<4x324xf32>
    %137 = vector.shape_cast %134 : vector<4x324xf32> to vector<1x4x324xf32>
    tpu.vector_store %arg7[%c0_116, %c0_117, %c0_118], %137 {strides = array<i32>} : memref<1x4x324xf32, #tpu.memory_space<vmem>>, vector<1x4x324xf32>,
    return
  }
  func.func @transform_0(%arg0: i32) -> (i32, i32, i32) {
    %c0_i32 = arith.constant 0 : i32
    %c0_i32_0 = arith.constant 0 : i32
    %c0_i32_1 = arith.constant 0 : i32
    return %arg0, %c0_i32, %c0_i32_0 : i32, i32, i32
  }
  func.func @transform_1(%arg0: i32) -> (i32, i32) {
    %c0_i32 = arith.constant 0 : i32
    %c0_i32_0 = arith.constant 0 : i32
    %c0_i32_1 = arith.constant 0 : i32
    return %c0_i32, %c0_i32_0 : i32, i32
  }
  func.func @transform_2(%arg0: i32) -> (i32, i32, i32) {
    %c0_i32 = arith.constant 0 : i32
    %c0_i32_0 = arith.constant 0 : i32
    %c0_i32_1 = arith.constant 0 : i32
    %c0_i32_2 = arith.constant 0 : i32
    return %c0_i32, %c0_i32_0, %c0_i32_1 : i32, i32, i32
  }
  func.func @transform_3(%arg0: i32) -> (i32, i32) {
    %c0_i32 = arith.constant 0 : i32
    %c0_i32_0 = arith.constant 0 : i32
    %c0_i32_1 = arith.constant 0 : i32
    return %c0_i32, %c0_i32_0 : i32, i32
  }
  func.func @transform_4(%arg0: i32) -> (i32, i32, i32) {
    %c0_i32 = arith.constant 0 : i32
    %c0_i32_0 = arith.constant 0 : i32
    %c0_i32_1 = arith.constant 0 : i32
    %c0_i32_2 = arith.constant 0 : i32
    return %c0_i32, %c0_i32_0, %c0_i32_1 : i32, i32, i32
  }
  func.func @transform_5(%arg0: i32) -> (i32, i32) {
    %c0_i32 = arith.constant 0 : i32
    %c0_i32_0 = arith.constant 0 : i32
    %c0_i32_1 = arith.constant 0 : i32
    return %c0_i32, %c0_i32_0 : i32, i32
  }
  func.func @transform_6(%arg0: i32) -> (i32, i32, i32) {
    %c0_i32 = arith.constant 0 : i32
    %c0_i32_0 = arith.constant 0 : i32
    %c0_i32_1 = arith.constant 0 : i32
    return %arg0, %c0_i32, %c0_i32_0 : i32, i32, i32
  }
}

</mosaic_0001>

<llo_original>
// kernel: tile.8
$region0: #{tile.8}
  #allocation0 [shape = 's32[1]{0}', space=sflag, size = 0x4, scoped, tag = 'scoped memory for tile.8']
  %s0 = inlined_call_operand.vmem [shape: f32[4], index: 0, kind: input, shape index: {}]
  %s1 = inlined_call_operand.vmem [shape: f32[4,4], index: 1, kind: output, shape index: {}]
  // Predicated region
  $region2: #{tile.8} parent=0 // pred_check
    _
  $region3: #{tile.8} parent=0 // pred_check_branch
    %3 = sbr.rel (0) target = $region5
  $region4: #{tile.8} parent=0 // pred_region
    _
  $region5: #{tile.8} parent=0 // pred_fallthru
    _
  %v4 = vld [vmem:[%s0] ss:$0 sm:$0xff]
  %5 = vst [vmem:[%s1] sm:$0xf] %v4

// kernel: tile.0
$region0: #{tile.0}
  %s0 = inlined_call_operand.vmem [shape: f32[4,4], index: 0, kind: input, shape index: {}]
  %s1 = inlined_call_operand.vmem [shape: f32[16,1], index: 1, kind: output, shape index: {}]
  $region1: #{tile.0} parent=0
    #allocation0 [shape = 'u8[4096]{0}', space=vmem, size = 0x1000, scoped, tag = 'scoped mem for input reshape']
    %s3 = sshllo.u32 0, 4
    %v4 = vld [vmem:[%s0] sm:%s3]
    %5 = vst [vmem:[#allocation0] sm:%s3] %v4
    %v6 = vld [vmem:[#allocation0] sm:$0xf]
    %vm7 = vcmask 7168
    %8 = vst.msk [vmem:[%s1] ss:$4 sm:$0xf] %vm7, %v6
    %v9 = vld [vmem:[#allocation0] sm:$0xf]
    %10 = vrot.lane.b32.xlu0 %v9, 127
    %v11 = vpop.permute.xlu0 %10
    %vm12 = vcmask 7168
    %s13 = scalar_lea.vmem %s1, 1
    %14 = vst.msk [vmem:[%s13] ss:$4 sm:$0xf] %vm12, %v11
    %v15 = vld [vmem:[#allocation0] sm:$0xf]
    %16 = vrot.lane.b32.xlu0 %v15, 126
    %v17 = vpop.permute.xlu0 %16
    %vm18 = vcmask 7168
    %s19 = scalar_lea.vmem %s1, 2
    %20 = vst.msk [vmem:[%s19] ss:$4 sm:$0xf] %vm18, %v17
    %v21 = vld [vmem:[#allocation0] sm:$0xf]
    %22 = vrot.lane.b32.xlu0 %v21, 125
    %v23 = vpop.permute.xlu0 %22
    %vm24 = vcmask 7168
    %s25 = scalar_lea.vmem %s1, 3
    %26 = vst.msk [vmem:[%s25] ss:$4 sm:$0xf] %vm24, %v23

// kernel: unet_up_block_forward.2
$region0: #{unet_up_block_forward.2}
  #allocation0 [shape = 'u32[]', space=smem, size = 0x4, offset = 0x4, fixed_abs, tag = 'smem constant byte address 0x4 - core index']
  #allocation1 [shape = 'u32[144,128]{1,0:T(1,128)}', space=vmem, size = 0x12000, scoped, tag = 'internal scratch']
  %s0 = inlined_call_operand.vmem [shape: bf16[8,128], index: 0, kind: input, shape index: {}]
  %s1 = inlined_call_operand.vmem [shape: bf16[16,8], index: 1, kind: input, shape index: {}]
  %s2 = inlined_call_operand.vmem [shape: f32[16,1], index: 2, kind: input, shape index: {}]
  %s3 = inlined_call_operand.vmem [shape: f32[16,128], index: 3, kind: output, shape index: {}]
  %s4 = sld [smem:[#allocation0]]
  $region22: #{unet_up_block_forward.2} parent=0
    _
  %s6 = ssub.s32 1, %s4
  %s7 = scalar_select 0, %s6, %s4
  // Predicated region
  $region2: #{unet_up_block_forward.2} parent=0 // pred_check
    _
  $region3: #{unet_up_block_forward.2} parent=0 // pred_check_branch
    %9 = sbr.rel (0) target = $region5
  $region4: #{unet_up_block_forward.2} parent=0 // pred_region
    _
  $region5: #{unet_up_block_forward.2} parent=0 // pred_fallthru
    _
  // Predicated region
  $region6: #{unet_up_block_forward.2} parent=0 // pred_check
    _
  $region7: #{unet_up_block_forward.2} parent=0 // pred_check_branch
    %11 = sbr.rel (0) target = $region9
  $region8: #{unet_up_block_forward.2} parent=0 // pred_region
    _
  $region9: #{unet_up_block_forward.2} parent=0 // pred_fallthru
    _
  // Predicated region
  $region10: #{unet_up_block_forward.2} parent=0 // pred_check
    _
  $region11: #{unet_up_block_forward.2} parent=0 // pred_check_branch
    %13 = sbr.rel (0) target = $region13
  $region12: #{unet_up_block_forward.2} parent=0 // pred_region
    _
  $region13: #{unet_up_block_forward.2} parent=0 // pred_fallthru
    _
  %v15 = vld [vmem:[%s1] sm:$0xf]
  %v16 = vld [vmem:[%s1 + $0x4] sm:$0xf]
  %v17 = vld [vmem:[%s0] sm:$0xf]
  %v18 = vld [vmem:[%s2] sm:$0xff]
  %v19 = vld [vmem:[%s2 + $0x8] sm:$0xff]
  %21 = vset.pattern.permute.xlu0 0
  %22 = vperm.xlu0 %21, %v18
  %v23 = vpop.permute.xlu0 %22
  %26 = vset.pattern.permute.xlu0 0
  %27 = vperm.xlu0 %26, %v19
  %v28 = vpop.permute.xlu0 %27
  %v32 = vunpack.c.l.b16 %v15
  %v33 = vunpack.c.l.b16 %v16
  %v34 = vpack.c.b16 %v33, %v32
  %vm35 = vcmask 64512
  %v37 = vsel %vm35, %v34, 0
  %vm39 = vcmask 1043456
  %v41 = vsel %vm39, %v17, 0
  %43 = vmatprep.subr.bf16.mxu0 0
  %44 = vmatpush1.bf16.msra.mxu0 %v41
  %45 = vmatprep.subr.bf16.mxu0 0
  %46 = vmatpush1.bf16.msra.mxu0 0
  %47 = vmatprep.subr.bf16.mxu0 0
  %48 = vmatpush1.bf16.msra.mxu0 0
  %49 = vmatprep.subr.bf16.mxu0 0
  %50 = vmatpush1.bf16.msra.mxu0 0
  %51 = vmatprep.subr.bf16.mxu0 0
  %52 = vmatpush1.bf16.msra.mxu0 0
  %53 = vmatprep.subr.bf16.mxu0 0
  %54 = vmatpush1.bf16.msra.mxu0 0
  %55 = vmatprep.subr.bf16.mxu0 0
  %56 = vmatpush1.bf16.msra.mxu0 0
  %57 = vmatprep.subr.bf16.mxu0 0
  %58 = vmatpush1.bf16.msra.mxu0 0
  %59 = vmatprep.subr.bf16.mxu0 0
  %60 = vmatpush1.bf16.msra.mxu0 0
  %61 = vmatprep.subr.bf16.mxu0 0
  %62 = vmatpush1.bf16.msra.mxu0 0
  %63 = vmatprep.subr.bf16.mxu0 0
  %64 = vmatpush1.bf16.msra.mxu0 0
  %65 = vmatprep.subr.bf16.mxu0 0
  %66 = vmatpush1.bf16.msra.mxu0 0
  %67 = vmatprep.subr.bf16.mxu0 0
  %68 = vmatpush1.bf16.msra.mxu0 0
  %69 = vmatprep.subr.bf16.mxu0 0
  %70 = vmatpush1.bf16.msra.mxu0 0
  %71 = vmatprep.subr.bf16.mxu0 0
  %72 = vmatpush1.bf16.msra.mxu0 0
  %73 = vmatprep.subr.bf16.mxu0 0
  %74 = vmatpush1.bf16.msra.mxu0 0
  %75 = vmatprep.mubr.bf16.mxu0 0
  %76 = vmatmul.mubr.bf16.gmra.mrb[0].mxu0 %v37
  %v77 = vpop.f32.mrb[0].mxu0
  %v78 = vadd.f32 %v23, %v77
  %v79 = vpop.f32.mrb[0].mxu0
  %v80 = vpop.f32.mrb[0].mxu0
  %v81 = vadd.f32 %v28, %v80
  %v82 = vpop.f32.mrb[0].mxu0
  %83 = vdwg.mxu0
  %84 = vst [vmem:[%s3] sm:$0xff] %v78
  %85 = vst [vmem:[%s3 + $0x8] sm:$0xff] %v81
  // Predicated region
  $region14: #{unet_up_block_forward.2} parent=0 // pred_check
    _
  $region15: #{unet_up_block_forward.2} parent=0 // pred_check_branch
    %87 = sbr.rel (0) target = $region17
  $region16: #{unet_up_block_forward.2} parent=0 // pred_region
    _
  $region17: #{unet_up_block_forward.2} parent=0 // pred_fallthru
    _
  // Predicated region
  $region18: #{unet_up_block_forward.2} parent=0 // pred_check
    _
  $region19: #{unet_up_block_forward.2} parent=0 // pred_check_branch
    %89 = sbr.rel (0) target = $region21
  $region20: #{unet_up_block_forward.2} parent=0 // pred_region
    _
  $region21: #{unet_up_block_forward.2} parent=0 // pred_fallthru
    _

// kernel: unet_up_block_forward.3
$region0: #{unet_up_block_forward.3}
  #allocation0 [shape = 'u32[]', space=smem, size = 0x4, offset = 0x4, fixed_abs, tag = 'smem constant byte address 0x4 - core index']
  #allocation1 [shape = 'u32[144,128]{1,0:T(1,128)}', space=vmem, size = 0x12000, scoped, tag = 'internal scratch']
  #allocation2 [shape = 'f32[4,362]{1,0:T(4,128)}', space=vmem, size = 0x1800, scoped, tag = 'scratch operand']
  %s0 = inlined_call_operand.vmem [shape: f32[2,8,362], index: 0, kind: input, shape index: {}]
  %s1 = inlined_call_operand.vmem [shape: f32[1,324], index: 1, kind: input, shape index: {}]
  %s2 = inlined_call_operand.vmem [shape: bf16[9,4,8], index: 2, kind: input, shape index: {}]
  %s3 = inlined_call_operand.vmem [shape: f32[4,1], index: 3, kind: input, shape index: {}]
  %s4 = inlined_call_operand.vmem [shape: bf16[9,4,4], index: 4, kind: input, shape index: {}]
  %s5 = inlined_call_operand.vmem [shape: f32[4,1], index: 5, kind: input, shape index: {}]
  %s6 = inlined_call_operand.vmem [shape: f32[2,4,324], index: 6, kind: output, shape index: {}]
  %s7 = sld [smem:[#allocation0]]
  $region57: #{unet_up_block_forward.3} parent=0
    _
  %s9 = ssub.s32 1, %s7
  %s10 = scalar_select 0, %s9, %s7
  loop: start=0, step=1, limit=4
  $region2: #{unet_up_block_forward.3} parent=0 // loop_pre_header
    _
  $region3: #{unet_up_block_forward.3} parent=0 // loop_header
    %s12 = sphi 0, %s16
    %p13 = scmp.ge.s32.totalorder %s12, 4
    %s22 = sphi 0, %s24
    %s25 = sphi 0, %s22
    %s26 = sphi 0, %s25
    %s42 = sphi 0, %s26
    %s46 = sphi 0, %s46
    %s48 = sphi 0, %s46
    %s49 = sphi 0, %s48
    %s63 = sphi 0, %s49
    %s67 = sphi 0, %s67
    %s69 = sphi 0, %s67
    %s70 = sphi 0, %s69
    %s84 = sphi 0, %s70
    %s88 = sphi 0, %s88
    %s90 = sphi 0, %s88
    %s91 = sphi 0, %s90
    %s105 = sphi 0, %s91
    %s109 = sphi 0, %s109
    %s111 = sphi 0, %s109
    %s112 = sphi 0, %s111
    %s126 = sphi 0, %s112
    %s130 = sphi 0, %s130
    %s132 = sphi 0, %s130
    %s133 = sphi 0, %s132
    %s147 = sphi 0, %s133
    %s153 = sphi 0, %s155
    %s156 = sphi 0, %s153
    %s157 = sphi 0, %s156
    %s173 = sphi 0, %s157
  $region4: #{unet_up_block_forward.3} parent=0 // loop_header_branch
    %15 = sbr.rel (%p13) target = $region8
  $region5: #{unet_up_block_forward.3} parent=0 // loop_body
    %s17 = ssub.s32 %s12, 1
    %s18 = ssub.s32 %s12, 2
    %s19 = sadd.s32 %s12, 1
    %s20 = ssub.s32 %s12, %s19
    %p21 = scmp.eq.s32.totalorder %s20, 0
    %s23 = sadd.s32 %s22, 1
    %s24 = scalar_select %p21, %s22, %s23
    %p27 = pneg %p21
    %p28 = scmp.eq.s32.totalorder %s12, 1
    %p29 = por %p27, %p28
    %p30 = scmp.ne.s32.totalorder %s22, %s25
    %p31 = scmp.eq.s32.totalorder %s12, 0
    %p32 = por %p30, %p31
    %p33 = scmp.ne.s32.totalorder %s22, %s25
    %p34 = scmp.eq.s32.totalorder %s17, 1
    %p35 = por %p33, %p34
    %p36 = scmp.ne.s32.totalorder %s25, %s26
    %p37 = scmp.eq.s32.totalorder %s17, 0
    %p38 = por %p36, %p37
    %p39 = scmp.ne.s32.totalorder %s25, %s26
    %p40 = scmp.eq.s32.totalorder %s18, 1
    %p41 = por %p39, %p40
    %p43 = scmp.ne.s32.totalorder %s26, %s42
    %p44 = scmp.eq.s32.totalorder %s18, 0
    %p45 = por %p43, %p44
    %s47 = sadd.s32 %s46, 1
    %p50 = scmp.eq.s32.totalorder %s12, 1
    %p51 = scmp.ne.s32.totalorder %s46, %s48
    %p52 = scmp.eq.s32.totalorder %s12, 0
    %p53 = por %p51, %p52
    %p54 = scmp.ne.s32.totalorder %s46, %s48
    %p55 = scmp.eq.s32.totalorder %s17, 1
    %p56 = por %p54, %p55
    %p57 = scmp.ne.s32.totalorder %s48, %s49
    %p58 = scmp.eq.s32.totalorder %s17, 0
    %p59 = por %p57, %p58
    %p60 = scmp.ne.s32.totalorder %s48, %s49
    %p61 = scmp.eq.s32.totalorder %s18, 1
    %p62 = por %p60, %p61
    %p64 = scmp.ne.s32.totalorder %s49, %s63
    %p65 = scmp.eq.s32.totalorder %s18, 0
    %p66 = por %p64, %p65
    %s68 = sadd.s32 %s67, 1
    %p71 = scmp.eq.s32.totalorder %s12, 1
    %p72 = scmp.ne.s32.totalorder %s67, %s69
    %p73 = scmp.eq.s32.totalorder %s12, 0
    %p74 = por %p72, %p73
    %p75 = scmp.ne.s32.totalorder %s67, %s69
    %p76 = scmp.eq.s32.totalorder %s17, 1
    %p77 = por %p75, %p76
    %p78 = scmp.ne.s32.totalorder %s69, %s70
    %p79 = scmp.eq.s32.totalorder %s17, 0
    %p80 = por %p78, %p79
    %p81 = scmp.ne.s32.totalorder %s69, %s70
    %p82 = scmp.eq.s32.totalorder %s18, 1
    %p83 = por %p81, %p82
    %p85 = scmp.ne.s32.totalorder %s70, %s84
    %p86 = scmp.eq.s32.totalorder %s18, 0
    %p87 = por %p85, %p86
    %s89 = sadd.s32 %s88, 1
    %p92 = scmp.eq.s32.totalorder %s12, 1
    %p93 = scmp.ne.s32.totalorder %s88, %s90
    %p94 = scmp.eq.s32.totalorder %s12, 0
    %p95 = por %p93, %p94
    %p96 = scmp.ne.s32.totalorder %s88, %s90
    %p97 = scmp.eq.s32.totalorder %s17, 1
    %p98 = por %p96, %p97
    %p99 = scmp.ne.s32.totalorder %s90, %s91
    %p100 = scmp.eq.s32.totalorder %s17, 0
    %p101 = por %p99, %p100
    %p102 = scmp.ne.s32.totalorder %s90, %s91
    %p103 = scmp.eq.s32.totalorder %s18, 1
    %p104 = por %p102, %p103
    %p106 = scmp.ne.s32.totalorder %s91, %s105
    %p107 = scmp.eq.s32.totalorder %s18, 0
    %p108 = por %p106, %p107
    %s110 = sadd.s32 %s109, 1
    %p113 = scmp.eq.s32.totalorder %s12, 1
    %p114 = scmp.ne.s32.totalorder %s109, %s111
    %p115 = scmp.eq.s32.totalorder %s12, 0
    %p116 = por %p114, %p115
    %p117 = scmp.ne.s32.totalorder %s109, %s111
    %p118 = scmp.eq.s32.totalorder %s17, 1
    %p119 = por %p117, %p118
    %p120 = scmp.ne.s32.totalorder %s111, %s112
    %p121 = scmp.eq.s32.totalorder %s17, 0
    %p122 = por %p120, %p121
    %p123 = scmp.ne.s32.totalorder %s111, %s112
    %p124 = scmp.eq.s32.totalorder %s18, 1
    %p125 = por %p123, %p124
    %p127 = scmp.ne.s32.totalorder %s112, %s126
    %p128 = scmp.eq.s32.totalorder %s18, 0
    %p129 = por %p127, %p128
    %s131 = sadd.s32 %s130, 1
    %p134 = scmp.eq.s32.totalorder %s12, 1
    %p135 = scmp.ne.s32.totalorder %s130, %s132
    %p136 = scmp.eq.s32.totalorder %s12, 0
    %p137 = por %p135, %p136
    %p138 = scmp.ne.s32.totalorder %s130, %s132
    %p139 = scmp.eq.s32.totalorder %s17, 1
    %p140 = por %p138, %p139
    %p141 = scmp.ne.s32.totalorder %s132, %s133
    %p142 = scmp.eq.s32.totalorder %s17, 0
    %p143 = por %p141, %p142
    %p144 = scmp.ne.s32.totalorder %s132, %s133
    %p145 = scmp.eq.s32.totalorder %s18, 1
    %p146 = por %p144, %p145
    %p148 = scmp.ne.s32.totalorder %s133, %s147
    %p149 = scmp.eq.s32.totalorder %s18, 0
    %p150 = por %p148, %p149
    %s151 = ssub.s32 %s12, %s19
    %p152 = scmp.eq.s32.totalorder %s151, 0
    %s154 = sadd.s32 %s153, 1
    %s155 = scalar_select %p152, %s153, %s154
    %p158 = pneg %p152
    %p159 = scmp.eq.s32.totalorder %s12, 1
    %p160 = por %p158, %p159
    %p161 = scmp.ne.s32.totalorder %s153, %s156
    %p162 = scmp.eq.s32.totalorder %s12, 0
    %p163 = por %p161, %p162
    %p164 = scmp.ne.s32.totalorder %s153, %s156
    %p165 = scmp.eq.s32.totalorder %s17, 1
    %p166 = por %p164, %p165
    %p167 = scmp.ne.s32.totalorder %s156, %s157
    %p168 = scmp.eq.s32.totalorder %s17, 0
    %p169 = por %p167, %p168
    %p170 = scmp.ne.s32.totalorder %s156, %s157
    %p171 = scmp.eq.s32.totalorder %s18, 1
    %p172 = por %p170, %p171
    %p174 = scmp.ne.s32.totalorder %s157, %s173
    %p175 = scmp.eq.s32.totalorder %s18, 0
    %p176 = por %p174, %p175
    %p177 = scmp.le.s32.totalorder 1, %s12
    %p178 = scmp.lt.s32.totalorder %s12, 3
    %p179 = pnand %p177, %p178
    %p180 = pneg %p179
    // Predicated region
    $region9: #{unet_up_block_forward.3} parent=5 // pred_check
      _
    $region10: #{unet_up_block_forward.3} parent=5 // pred_check_branch
      %182 = sbr.rel (%p179) target = $region12
    $region11: #{unet_up_block_forward.3} parent=5 // pred_region
      %s183 = ssub.s32 %s12, 1
      // Predicated region
      $region13: #{unet_up_block_forward.3} parent=11 // pred_check
        %p184 = pneg %p59
      $region14: #{unet_up_block_forward.3} parent=11 // pred_check_branch
        %186 = sbr.rel (%p184) target = $region16
      $region15: #{unet_up_block_forward.3} parent=11 // pred_region
        _
      $region16: #{unet_up_block_forward.3} parent=11 // pred_fallthru
        _
      // Predicated region
      $region17: #{unet_up_block_forward.3} parent=11 // pred_check
        %p187 = pneg %p80
      $region18: #{unet_up_block_forward.3} parent=11 // pred_check_branch
        %189 = sbr.rel (%p187) target = $region20
      $region19: #{unet_up_block_forward.3} parent=11 // pred_region
        _
      $region20: #{unet_up_block_forward.3} parent=11 // pred_fallthru
        _
      // Predicated region
      $region21: #{unet_up_block_forward.3} parent=11 // pred_check
        %p190 = pneg %p101
      $region22: #{unet_up_block_forward.3} parent=11 // pred_check_branch
        %192 = sbr.rel (%p190) target = $region24
      $region23: #{unet_up_block_forward.3} parent=11 // pred_region
        _
      $region24: #{unet_up_block_forward.3} parent=11 // pred_fallthru
        _
      // Predicated region
      $region25: #{unet_up_block_forward.3} parent=11 // pred_check
        %p193 = pneg %p122
      $region26: #{unet_up_block_forward.3} parent=11 // pred_check_branch
        %195 = sbr.rel (%p193) target = $region28
      $region27: #{unet_up_block_forward.3} parent=11 // pred_region
        _
      $region28: #{unet_up_block_forward.3} parent=11 // pred_fallthru
        _
      // Predicated region
      $region29: #{unet_up_block_forward.3} parent=11 // pred_check
        %p196 = pneg %p143
      $region30: #{unet_up_block_forward.3} parent=11 // pred_check_branch
        %198 = sbr.rel (%p196) target = $region32
      $region31: #{unet_up_block_forward.3} parent=11 // pred_region
        _
      $region32: #{unet_up_block_forward.3} parent=11 // pred_fallthru
        _
    $region12: #{unet_up_block_forward.3} parent=5 // pred_fallthru
      _
    %p199 = scmp.lt.s32.totalorder %s12, 2
    // Predicated region
    $region33: #{unet_up_block_forward.3} parent=5 // pred_check
      %p200 = pneg %p199
    $region34: #{unet_up_block_forward.3} parent=5 // pred_check_branch
      %202 = sbr.rel (%p200) target = $region36
    $region35: #{unet_up_block_forward.3} parent=5 // pred_region
      // Predicated region
      $region37: #{unet_up_block_forward.3} parent=35 // pred_check
        %p203 = pneg %p32
      $region38: #{unet_up_block_forward.3} parent=35 // pred_check_branch
        %205 = sbr.rel (%p203) target = $region40
      $region39: #{unet_up_block_forward.3} parent=35 // pred_region
        %p206 = scmp.lt.s32.totalorder %s12, 1
        %s207 = scalar_select %p206, %s12, 1
        %s208 = smul.addr %s207, 3
        %s209 = smul.addr %s208, 8
        %s210 = scalar_lea.vmem %s0, %s209
      $region40: #{unet_up_block_forward.3} parent=35 // pred_fallthru
        _
    $region36: #{unet_up_block_forward.3} parent=5 // pred_fallthru
      _
    %p211 = scmp.le.s32.totalorder 1, %s12
    %p212 = scmp.lt.s32.totalorder %s12, 3
    %p213 = pnand %p211, %p212
    %p214 = pneg %p213
    // Predicated region
    $region41: #{unet_up_block_forward.3} parent=5 // pred_check
      _
    $region42: #{unet_up_block_forward.3} parent=5 // pred_check_branch
      %216 = sbr.rel (%p213) target = $region44
    $region43: #{unet_up_block_forward.3} parent=5 // pred_region
      %s217 = ssub.s32 %s12, 1
      %p218 = scmp.lt.s32.totalorder %s17, 1
      %s219 = scalar_select %p218, %s17, 1
      %s220 = smul.addr %s219, 3
      %s221 = smul.addr %s220, 8
      %s222 = scalar_lea.vmem %s0, %s221
      %p223 = pneg %p38
      %p224 = pneg %p35
      %p225 = pneg %p59
      %p226 = pneg %p56
      %p227 = pneg %p80
      %p228 = pneg %p77
      %p229 = pneg %p101
      %p230 = pneg %p98
      %p231 = pneg %p122
      %p232 = pneg %p119
      %p233 = pneg %p143
      %p234 = pneg %p140
      %p235 = pneg %p169
      %p236 = pneg %p166
      %p237 = scmp.lt.s32.totalorder %s17, 1
      %s238 = scalar_select %p237, %s17, 1
      %s239 = smul.addr %s238, 3
      %s240 = smul.addr %s239, 4
      %s241 = scalar_lea.vmem %s6, %s240
      %p242 = scmp.lt.s32.totalorder %s17, 1
      %s243 = scalar_select %p242, %s17, 1
      %s244 = smul.addr %s243, 3
      %s245 = smul.addr %s244, 8
      %s246 = scalar_lea.vmem %s0, %s245
      %p247 = scmp.lt.s32.totalorder %s17, 1
      %s248 = scalar_select %p247, %s17, 1
      %s249 = smul.addr %s248, 3
      %s250 = smul.addr %s249, 4
      %s251 = scalar_lea.vmem %s6, %s250
      %v253 = vld [vmem:[%s246] sm:$0xff]
      %v254 = vld [vmem:[%s246 + $0x8] sm:$0xff]
      %v255 = vld [vmem:[%s246 + $0x10] sm:$0xff]
      %v256 = vpack.c.bf16 %v253, %v253
      %v257 = vpack.c.bf16 %v254, %v254
      %v258 = vpack.c.bf16 %v255, %v255
      %v259 = vld [vmem:[%s2] sm:$0x3]
      %s260 = scalar_lea.vmem %s2, 2
      %v261 = vld [vmem:[%s260] sm:$0x3]
      %265 = vrot.lane.b32.xlu0 %v256, 127
      %v266 = vpop.permute.xlu0 %265
      %267 = vrot.lane.b32.xlu0 %v257, 127
      %v268 = vpop.permute.xlu0 %267
      %269 = vrot.lane.b32.xlu0 %v258, 127
      %v270 = vpop.permute.xlu0 %269
      %vm271 = vcmask 1039360
      %v272 = vsel %vm271, %v266, %v268
      %v273 = vsel %vm271, %v268, %v270
      %vm274 = vcmask 64512
      %v276 = vsel %vm274, %v261, 0
      %vm278 = vcmask 1043456
      %v280 = vsel %vm278, %v272, 0
      %v283 = vsel %vm278, %v273, 0
      %v286 = vsel %vm278, %v270, 0
      %288 = vmatprep.subr.bf16.mxu0 %v283
      %289 = vmatpush1.bf16.msra.mxu0 %v280
      %290 = vmatprep.subr.bf16.mxu0 0
      %291 = vmatpush1.bf16.msra.mxu0 0
      %292 = vmatprep.subr.bf16.mxu0 0
      %293 = vmatpush1.bf16.msra.mxu0 0
      %294 = vmatprep.subr.bf16.mxu0 0
      %295 = vmatpush1.bf16.msra.mxu0 0
      %296 = vmatprep.subr.bf16.mxu0 0
      %297 = vmatpush1.bf16.msra.mxu0 0
      %298 = vmatprep.subr.bf16.mxu0 0
      %299 = vmatpush1.bf16.msra.mxu0 0
      %300 = vmatprep.subr.bf16.mxu0 0
      %301 = vmatpush1.bf16.msra.mxu0 0
      %302 = vmatprep.subr.bf16.mxu0 0
      %303 = vmatpush1.bf16.msra.mxu0 0
      %304 = vmatprep.subr.bf16.mxu0 0
      %305 = vmatpush1.bf16.msra.mxu0 0
      %306 = vmatprep.subr.bf16.mxu0 0
      %307 = vmatpush1.bf16.msra.mxu0 0
      %308 = vmatprep.subr.bf16.mxu0 0
      %309 = vmatpush1.bf16.msra.mxu0 0
      %310 = vmatprep.subr.bf16.mxu0 0
      %311 = vmatpush1.bf16.msra.mxu0 0
      %312 = vmatprep.subr.bf16.mxu0 0
      %313 = vmatpush1.bf16.msra.mxu0 0
      %314 = vmatprep.subr.bf16.mxu0 0
      %315 = vmatpush1.bf16.msra.mxu0 0
      %316 = vmatprep.subr.bf16.mxu0 0
      %317 = vmatpush1.bf16.msra.mxu0 0
      %318 = vmatprep.subr.bf16.mxu0 0
      %319 = vmatpush1.bf16.msra.mxu0 0
      %320 = vmatprep.mubr.bf16.mxu0 0
      %321 = vmatmul.mubr.bf16.gmra.mrb[0].mxu0 %v276
      %v322 = vpop.f32.mrb[0].mxu0
      %v323 = vadd.f32 0.0, %v322
      %v324 = vpop.f32.mrb[0].mxu0
      %v325 = vadd.f32 0.0, %v324
      %v326 = vpop.f32.mrb[0].mxu0
      %v327 = vpop.f32.mrb[0].mxu0
      %328 = vdwg.mxu0
      %329 = vmatprep.subr.bf16.mxu0 0
      %330 = vmatpush1.bf16.msra.mxu0 %v286
      %331 = vmatprep.subr.bf16.mxu0 0
      %332 = vmatpush1.bf16.msra.mxu0 0
      %333 = vmatprep.subr.bf16.mxu0 0
      %334 = vmatpush1.bf16.msra.mxu0 0
      %335 = vmatprep.subr.bf16.mxu0 0
      %336 = vmatpush1.bf16.msra.mxu0 0
      %337 = vmatprep.subr.bf16.mxu0 0
      %338 = vmatpush1.bf16.msra.mxu0 0
      %339 = vmatprep.subr.bf16.mxu0 0
      %340 = vmatpush1.bf16.msra.mxu0 0
      %341 = vmatprep.subr.bf16.mxu0 0
      %342 = vmatpush1.bf16.msra.mxu0 0
      %343 = vmatprep.subr.bf16.mxu0 0
      %344 = vmatpush1.bf16.msra.mxu0 0
      %345 = vmatprep.subr.bf16.mxu0 0
      %346 = vmatpush1.bf16.msra.mxu0 0
      %347 = vmatprep.subr.bf16.mxu0 0
      %348 = vmatpush1.bf16.msra.mxu0 0
      %349 = vmatprep.subr.bf16.mxu0 0
      %350 = vmatpush1.bf16.msra.mxu0 0
      %351 = vmatprep.subr.bf16.mxu0 0
      %352 = vmatpush1.bf16.msra.mxu0 0
      %353 = vmatprep.subr.bf16.mxu0 0
      %354 = vmatpush1.bf16.msra.mxu0 0
      %355 = vmatprep.subr.bf16.mxu0 0
      %356 = vmatpush1.bf16.msra.mxu0 0
      %357 = vmatprep.subr.bf16.mxu0 0
      %358 = vmatpush1.bf16.msra.mxu0 0
      %359 = vmatprep.subr.bf16.mxu0 0
      %360 = vmatpush1.bf16.msra.mxu0 0
      %361 = vmatprep.mubr.bf16.mxu0 0
      %362 = vmatmul.mubr.bf16.gmra.mrb[0].mxu0 %v276
      %v363 = vpop.f32.mrb[0].mxu0
      %v364 = vadd.f32 0.0, %v363
      %v365 = vpop.f32.mrb[0].mxu0
      %v366 = vpop.f32.mrb[0].mxu0
      %v367 = vpop.f32.mrb[0].mxu0
      %368 = vdwg.mxu0
      %v370 = vsel %vm274, %v259, 0
      %v373 = vsel %vm278, %v256, 0
      %v376 = vsel %vm278, %v257, 0
      %v379 = vsel %vm278, %v258, 0
      %381 = vmatprep.subr.bf16.mxu0 %v376
      %382 = vmatpush1.bf16.msra.mxu0 %v373
      %383 = vmatprep.subr.bf16.mxu0 0
      %384 = vmatpush1.bf16.msra.mxu0 0
      %385 = vmatprep.subr.bf16.mxu0 0
      %386 = vmatpush1.bf16.msra.mxu0 0
      %387 = vmatprep.subr.bf16.mxu0 0
      %388 = vmatpush1.bf16.msra.mxu0 0
      %389 = vmatprep.subr.bf16.mxu0 0
      %390 = vmatpush1.bf16.msra.mxu0 0
      %391 = vmatprep.subr.bf16.mxu0 0
      %392 = vmatpush1.bf16.msra.mxu0 0
      %393 = vmatprep.subr.bf16.mxu0 0
      %394 = vmatpush1.bf16.msra.mxu0 0
      %395 = vmatprep.subr.bf16.mxu0 0
      %396 = vmatpush1.bf16.msra.mxu0 0
      %397 = vmatprep.subr.bf16.mxu0 0
      %398 = vmatpush1.bf16.msra.mxu0 0
      %399 = vmatprep.subr.bf16.mxu0 0
      %400 = vmatpush1.bf16.msra.mxu0 0
      %401 = vmatprep.subr.bf16.mxu0 0
      %402 = vmatpush1.bf16.msra.mxu0 0
      %403 = vmatprep.subr.bf16.mxu0 0
      %404 = vmatpush1.bf16.msra.mxu0 0
      %405 = vmatprep.subr.bf16.mxu0 0
      %406 = vmatpush1.bf16.msra.mxu0 0
      %407 = vmatprep.subr.bf16.mxu0 0
      %408 = vmatpush1.bf16.msra.mxu0 0
      %409 = vmatprep.subr.bf16.mxu0 0
      %410 = vmatpush1.bf16.msra.mxu0 0
      %411 = vmatprep.subr.bf16.mxu0 0
      %412 = vmatpush1.bf16.msra.mxu0 0
      %413 = vmatprep.mubr.bf16.mxu0 0
      %414 = vmatmul.mubr.bf16.gmra.mrb[0].mxu0 %v370
      %v415 = vpop.f32.mrb[0].mxu0
      %v416 = vadd.f32 %v323, %v415
      %v417 = vpop.f32.mrb[0].mxu0
      %v418 = vadd.f32 %v325, %v417
      %v419 = vpop.f32.mrb[0].mxu0
      %v420 = vpop.f32.mrb[0].mxu0
      %421 = vdwg.mxu0
      %422 = vmatprep.subr.bf16.mxu0 0
      %423 = vmatpush1.bf16.msra.mxu0 %v379
      %424 = vmatprep.subr.bf16.mxu0 0
      %425 = vmatpush1.bf16.msra.mxu0 0
      %426 = vmatprep.subr.bf16.mxu0 0
      %427 = vmatpush1.bf16.msra.mxu0 0
      %428 = vmatprep.subr.bf16.mxu0 0
      %429 = vmatpush1.bf16.msra.mxu0 0
      %430 = vmatprep.subr.bf16.mxu0 0
      %431 = vmatpush1.bf16.msra.mxu0 0
      %432 = vmatprep.subr.bf16.mxu0 0
      %433 = vmatpush1.bf16.msra.mxu0 0
      %434 = vmatprep.subr.bf16.mxu0 0
      %435 = vmatpush1.bf16.msra.mxu0 0
      %436 = vmatprep.subr.bf16.mxu0 0
      %437 = vmatpush1.bf16.msra.mxu0 0
      %438 = vmatprep.subr.bf16.mxu0 0
      %439 = vmatpush1.bf16.msra.mxu0 0
      %440 = vmatprep.subr.bf16.mxu0 0
      %441 = vmatpush1.bf16.msra.mxu0 0
      %442 = vmatprep.subr.bf16.mxu0 0
      %443 = vmatpush1.bf16.msra.mxu0 0
      %444 = vmatprep.subr.bf16.mxu0 0
      %445 = vmatpush1.bf16.msra.mxu0 0
      %446 = vmatprep.subr.bf16.mxu0 0
      %447 = vmatpush1.bf16.msra.mxu0 0
      %448 = vmatprep.subr.bf16.mxu0 0
      %449 = vmatpush1.bf16.msra.mxu0 0
      %450 = vmatprep.subr.bf16.mxu0 0
      %451 = vmatpush1.bf16.msra.mxu0 0
      %452 = vmatprep.subr.bf16.mxu0 0
      %453 = vmatpush1.bf16.msra.mxu0 0
      %454 = vmatprep.mubr.bf16.mxu0 0
      %455 = vmatmul.mubr.bf16.gmra.mrb[0].mxu0 %v370
      %v456 = vpop.f32.mrb[0].mxu0
      %v457 = vadd.f32 %v364, %v456
      %v458 = vpop.f32.mrb[0].mxu0
      %v459 = vpop.f32.mrb[0].mxu0
      %v460 = vpop.f32.mrb[0].mxu0
      %461 = vdwg.mxu0
      %s462 = scalar_lea.vmem %s2, 4
      %v463 = vld [vmem:[%s462] sm:$0x3]
      %464 = vrot.lane.b32.xlu0 %v256, 126
      %v465 = vpop.permute.xlu0 %464
      %466 = vrot.lane.b32.xlu0 %v257, 126
      %v467 = vpop.permute.xlu0 %466
      %468 = vrot.lane.b32.xlu0 %v258, 126
      %v469 = vpop.permute.xlu0 %468
      %vm470 = vcmask 1031168
      %v471 = vsel %vm470, %v465, %v467
      %v472 = vsel %vm470, %v467, %v469
      %v474 = vsel %vm274, %v463, 0
      %v477 = vsel %vm278, %v471, 0
      %v480 = vsel %vm278, %v472, 0
      %v483 = vsel %vm278, %v469, 0
      %485 = vmatprep.subr.bf16.mxu0 %v480
      %486 = vmatpush1.bf16.msra.mxu0 %v477
      %487 = vmatprep.subr.bf16.mxu0 0
      %488 = vmatpush1.bf16.msra.mxu0 0
      %489 = vmatprep.subr.bf16.mxu0 0
      %490 = vmatpush1.bf16.msra.mxu0 0
      %491 = vmatprep.subr.bf16.mxu0 0
      %492 = vmatpush1.bf16.msra.mxu0 0
      %493 = vmatprep.subr.bf16.mxu0 0
      %494 = vmatpush1.bf16.msra.mxu0 0
      %495 = vmatprep.subr.bf16.mxu0 0
      %496 = vmatpush1.bf16.msra.mxu0 0
      %497 = vmatprep.subr.bf16.mxu0 0
      %498 = vmatpush1.bf16.msra.mxu0 0
      %499 = vmatprep.subr.bf16.mxu0 0
      %500 = vmatpush1.bf16.msra.mxu0 0
      %501 = vmatprep.subr.bf16.mxu0 0
      %502 = vmatpush1.bf16.msra.mxu0 0
      %503 = vmatprep.subr.bf16.mxu0 0
      %504 = vmatpush1.bf16.msra.mxu0 0
      %505 = vmatprep.subr.bf16.mxu0 0
      %506 = vmatpush1.bf16.msra.mxu0 0
      %507 = vmatprep.subr.bf16.mxu0 0
      %508 = vmatpush1.bf16.msra.mxu0 0
      %509 = vmatprep.subr.bf16.mxu0 0
      %510 = vmatpush1.bf16.msra.mxu0 0
      %511 = vmatprep.subr.bf16.mxu0 0
      %512 = vmatpush1.bf16.msra.mxu0 0
      %513 = vmatprep.subr.bf16.mxu0 0
      %514 = vmatpush1.bf16.msra.mxu0 0
      %515 = vmatprep.subr.bf16.mxu0 0
      %516 = vmatpush1.bf16.msra.mxu0 0
      %517 = vmatprep.mubr.bf16.mxu0 0
      %518 = vmatmul.mubr.bf16.gmra.mrb[0].mxu0 %v474
      %v519 = vpop.f32.mrb[0].mxu0
      %v520 = vadd.f32 0.0, %v519
      %v521 = vpop.f32.mrb[0].mxu0
      %v522 = vadd.f32 0.0, %v521
      %v523 = vpop.f32.mrb[0].mxu0
      %v524 = vpop.f32.mrb[0].mxu0
      %525 = vdwg.mxu0
      %526 = vmatprep.subr.bf16.mxu0 0
      %527 = vmatpush1.bf16.msra.mxu0 %v483
      %528 = vmatprep.subr.bf16.mxu0 0
      %529 = vmatpush1.bf16.msra.mxu0 0
      %530 = vmatprep.subr.bf16.mxu0 0
      %531 = vmatpush1.bf16.msra.mxu0 0
      %532 = vmatprep.subr.bf16.mxu0 0
      %533 = vmatpush1.bf16.msra.mxu0 0
      %534 = vmatprep.subr.bf16.mxu0 0
      %535 = vmatpush1.bf16.msra.mxu0 0
      %536 = vmatprep.subr.bf16.mxu0 0
      %537 = vmatpush1.bf16.msra.mxu0 0
      %538 = vmatprep.subr.bf16.mxu0 0
      %539 = vmatpush1.bf16.msra.mxu0 0
      %540 = vmatprep.subr.bf16.mxu0 0
      %541 = vmatpush1.bf16.msra.mxu0 0
      %542 = vmatprep.subr.bf16.mxu0 0
      %543 = vmatpush1.bf16.msra.mxu0 0
      %544 = vmatprep.subr.bf16.mxu0 0
      %545 = vmatpush1.bf16.msra.mxu0 0
      %546 = vmatprep.subr.bf16.mxu0 0
      %547 = vmatpush1.bf16.msra.mxu0 0
      %548 = vmatprep.subr.bf16.mxu0 0
      %549 = vmatpush1.bf16.msra.mxu0 0
      %550 = vmatprep.subr.bf16.mxu0 0
      %551 = vmatpush1.bf16.msra.mxu0 0
      %552 = vmatprep.subr.bf16.mxu0 0
      %553 = vmatpush1.bf16.msra.mxu0 0
      %554 = vmatprep.subr.bf16.mxu0 0
      %555 = vmatpush1.bf16.msra.mxu0 0
      %556 = vmatprep.subr.bf16.mxu0 0
      %557 = vmatpush1.bf16.msra.mxu0 0
      %558 = vmatprep.mubr.bf16.mxu0 0
      %559 = vmatmul.mubr.bf16.gmra.mrb[0].mxu0 %v474
      %v560 = vpop.f32.mrb[0].mxu0
      %v561 = vadd.f32 0.0, %v560
      %v562 = vpop.f32.mrb[0].mxu0
      %v563 = vpop.f32.mrb[0].mxu0
      %v564 = vpop.f32.mrb[0].mxu0
      %565 = vdwg.mxu0
      %v566 = vadd.f32 %v416, %v520
      %v567 = vadd.f32 %v418, %v522
      %v568 = vadd.f32 %v457, %v561
      %s569 = scalar_lea.vmem %s2, 6
      %v570 = vld [vmem:[%s569] sm:$0x3]
      %571 = vrot.lane.b32.xlu0 %v256, 110
      %v572 = vpop.permute.xlu0 %571
      %573 = vrot.lane.b32.xlu0 %v257, 110
      %v574 = vpop.permute.xlu0 %573
      %575 = vrot.lane.b32.xlu0 %v258, 110
      %v576 = vpop.permute.xlu0 %575
      %vm577 = vcmask 900096
      %v578 = vsel %vm577, %v572, %v574
      %v579 = vsel %vm577, %v574, %v576
      %v581 = vsel %vm274, %v570, 0
      %v584 = vsel %vm278, %v578, 0
      %v587 = vsel %vm278, %v579, 0
      %v590 = vsel %vm278, %v576, 0
      %592 = vmatprep.subr.bf16.mxu0 %v587
      %593 = vmatpush1.bf16.msra.mxu0 %v584
      %594 = vmatprep.subr.bf16.mxu0 0
      %595 = vmatpush1.bf16.msra.mxu0 0
      %596 = vmatprep.subr.bf16.mxu0 0
      %597 = vmatpush1.bf16.msra.mxu0 0
      %598 = vmatprep.subr.bf16.mxu0 0
      %599 = vmatpush1.bf16.msra.mxu0 0
      %600 = vmatprep.subr.bf16.mxu0 0
      %601 = vmatpush1.bf16.msra.mxu0 0
      %602 = vmatprep.subr.bf16.mxu0 0
      %603 = vmatpush1.bf16.msra.mxu0 0
      %604 = vmatprep.subr.bf16.mxu0 0
      %605 = vmatpush1.bf16.msra.mxu0 0
      %606 = vmatprep.subr.bf16.mxu0 0
      %607 = vmatpush1.bf16.msra.mxu0 0
      %608 = vmatprep.subr.bf16.mxu0 0
      %609 = vmatpush1.bf16.msra.mxu0 0
      %610 = vmatprep.subr.bf16.mxu0 0
      %611 = vmatpush1.bf16.msra.mxu0 0
      %612 = vmatprep.subr.bf16.mxu0 0
      %613 = vmatpush1.bf16.msra.mxu0 0
      %614 = vmatprep.subr.bf16.mxu0 0
      %615 = vmatpush1.bf16.msra.mxu0 0
      %616 = vmatprep.subr.bf16.mxu0 0
      %617 = vmatpush1.bf16.msra.mxu0 0
      %618 = vmatprep.subr.bf16.mxu0 0
      %619 = vmatpush1.bf16.msra.mxu0 0
      %620 = vmatprep.subr.bf16.mxu0 0
      %621 = vmatpush1.bf16.msra.mxu0 0
      %622 = vmatprep.subr.bf16.mxu0 0
      %623 = vmatpush1.bf16.msra.mxu0 0
      %624 = vmatprep.mubr.bf16.mxu0 0
      %625 = vmatmul.mubr.bf16.gmra.mrb[0].mxu0 %v581
      %v626 = vpop.f32.mrb[0].mxu0
      %v627 = vadd.f32 0.0, %v626
      %v628 = vpop.f32.mrb[0].mxu0
      %v629 = vadd.f32 0.0, %v628
      %v630 = vpop.f32.mrb[0].mxu0
      %v631 = vpop.f32.mrb[0].mxu0
      %632 = vdwg.mxu0
      %633 = vmatprep.subr.bf16.mxu0 0
      %634 = vmatpush1.bf16.msra.mxu0 %v590
      %635 = vmatprep.subr.bf16.mxu0 0
      %636 = vmatpush1.bf16.msra.mxu0 0
      %637 = vmatprep.subr.bf16.mxu0 0
      %638 = vmatpush1.bf16.msra.mxu0 0
      %639 = vmatprep.subr.bf16.mxu0 0
      %640 = vmatpush1.bf16.msra.mxu0 0
      %641 = vmatprep.subr.bf16.mxu0 0
      %642 = vmatpush1.bf16.msra.mxu0 0
      %643 = vmatprep.subr.bf16.mxu0 0
      %644 = vmatpush1.bf16.msra.mxu0 0
      %645 = vmatprep.subr.bf16.mxu0 0
      %646 = vmatpush1.bf16.msra.mxu0 0
      %647 = vmatprep.subr.bf16.mxu0 0
      %648 = vmatpush1.bf16.msra.mxu0 0
      %649 = vmatprep.subr.bf16.mxu0 0
      %650 = vmatpush1.bf16.msra.mxu0 0
      %651 = vmatprep.subr.bf16.mxu0 0
      %652 = vmatpush1.bf16.msra.mxu0 0
      %653 = vmatprep.subr.bf16.mxu0 0
      %654 = vmatpush1.bf16.msra.mxu0 0
      %655 = vmatprep.subr.bf16.mxu0 0
      %656 = vmatpush1.bf16.msra.mxu0 0
      %657 = vmatprep.subr.bf16.mxu0 0
      %658 = vmatpush1.bf16.msra.mxu0 0
      %659 = vmatprep.subr.bf16.mxu0 0
      %660 = vmatpush1.bf16.msra.mxu0 0
      %661 = vmatprep.subr.bf16.mxu0 0
      %662 = vmatpush1.bf16.msra.mxu0 0
      %663 = vmatprep.subr.bf16.mxu0 0
      %664 = vmatpush1.bf16.msra.mxu0 0
      %665 = vmatprep.mubr.bf16.mxu0 0
      %666 = vmatmul.mubr.bf16.gmra.mrb[0].mxu0 %v581
      %v667 = vpop.f32.mrb[0].mxu0
      %v668 = vadd.f32 0.0, %v667
      %v669 = vpop.f32.mrb[0].mxu0
      %v670 = vpop.f32.mrb[0].mxu0
      %v671 = vpop.f32.mrb[0].mxu0
      %672 = vdwg.mxu0
      %v673 = vadd.f32 %v566, %v627
      %v674 = vadd.f32 %v567, %v629
      %v675 = vadd.f32 %v568, %v668
      %s676 = scalar_lea.vmem %s2, 8
      %v677 = vld [vmem:[%s676] sm:$0x3]
      %678 = vrot.lane.b32.xlu0 %v256, 109
      %v679 = vpop.permute.xlu0 %678
      %680 = vrot.lane.b32.xlu0 %v257, 109
      %v681 = vpop.permute.xlu0 %680
      %682 = vrot.lane.b32.xlu0 %v258, 109
      %v683 = vpop.permute.xlu0 %682
      %vm684 = vcmask 891904
      %v685 = vsel %vm684, %v679, %v681
      %v686 = vsel %vm684, %v681, %v683
      %v688 = vsel %vm274, %v677, 0
      %v691 = vsel %vm278, %v685, 0
      %v694 = vsel %vm278, %v686, 0
      %v697 = vsel %vm278, %v683, 0
      %699 = vmatprep.subr.bf16.mxu0 %v694
      %700 = vmatpush1.bf16.msra.mxu0 %v691
      %701 = vmatprep.subr.bf16.mxu0 0
      %702 = vmatpush1.bf16.msra.mxu0 0
      %703 = vmatprep.subr.bf16.mxu0 0
      %704 = vmatpush1.bf16.msra.mxu0 0
      %705 = vmatprep.subr.bf16.mxu0 0
      %706 = vmatpush1.bf16.msra.mxu0 0
      %707 = vmatprep.subr.bf16.mxu0 0
      %708 = vmatpush1.bf16.msra.mxu0 0
      %709 = vmatprep.subr.bf16.mxu0 0
      %710 = vmatpush1.bf16.msra.mxu0 0
      %711 = vmatprep.subr.bf16.mxu0 0
      %712 = vmatpush1.bf16.msra.mxu0 0
      %713 = vmatprep.subr.bf16.mxu0 0
      %714 = vmatpush1.bf16.msra.mxu0 0
      %715 = vmatprep.subr.bf16.mxu0 0
      %716 = vmatpush1.bf16.msra.mxu0 0
      %717 = vmatprep.subr.bf16.mxu0 0
      %718 = vmatpush1.bf16.msra.mxu0 0
      %719 = vmatprep.subr.bf16.mxu0 0
      %720 = vmatpush1.bf16.msra.mxu0 0
      %721 = vmatprep.subr.bf16.mxu0 0
      %722 = vmatpush1.bf16.msra.mxu0 0
      %723 = vmatprep.subr.bf16.mxu0 0
      %724 = vmatpush1.bf16.msra.mxu0 0
      %725 = vmatprep.subr.bf16.mxu0 0
      %726 = vmatpush1.bf16.msra.mxu0 0
      %727 = vmatprep.subr.bf16.mxu0 0
      %728 = vmatpush1.bf16.msra.mxu0 0
      %729 = vmatprep.subr.bf16.mxu0 0
      %730 = vmatpush1.bf16.msra.mxu0 0
      %731 = vmatprep.mubr.bf16.mxu0 0
      %732 = vmatmul.mubr.bf16.gmra.mrb[0].mxu0 %v688
      %v733 = vpop.f32.mrb[0].mxu0
      %v734 = vadd.f32 0.0, %v733
      %v735 = vpop.f32.mrb[0].mxu0
      %v736 = vadd.f32 0.0, %v735
      %v737 = vpop.f32.mrb[0].mxu0
      %v738 = vpop.f32.mrb[0].mxu0
      %739 = vdwg.mxu0
      %740 = vmatprep.subr.bf16.mxu0 0
      %741 = vmatpush1.bf16.msra.mxu0 %v697
      %742 = vmatprep.subr.bf16.mxu0 0
      %743 = vmatpush1.bf16.msra.mxu0 0
      %744 = vmatprep.subr.bf16.mxu0 0
      %745 = vmatpush1.bf16.msra.mxu0 0
      %746 = vmatprep.subr.bf16.mxu0 0
      %747 = vmatpush1.bf16.msra.mxu0 0
      %748 = vmatprep.subr.bf16.mxu0 0
      %749 = vmatpush1.bf16.msra.mxu0 0
      %750 = vmatprep.subr.bf16.mxu0 0
      %751 = vmatpush1.bf16.msra.mxu0 0
      %752 = vmatprep.subr.bf16.mxu0 0
      %753 = vmatpush1.bf16.msra.mxu0 0
      %754 = vmatprep.subr.bf16.mxu0 0
      %755 = vmatpush1.bf16.msra.mxu0 0
      %756 = vmatprep.subr.bf16.mxu0 0
      %757 = vmatpush1.bf16.msra.mxu0 0
      %758 = vmatprep.subr.bf16.mxu0 0
      %759 = vmatpush1.bf16.msra.mxu0 0
      %760 = vmatprep.subr.bf16.mxu0 0
      %761 = vmatpush1.bf16.msra.mxu0 0
      %762 = vmatprep.subr.bf16.mxu0 0
      %763 = vmatpush1.bf16.msra.mxu0 0
      %764 = vmatprep.subr.bf16.mxu0 0
      %765 = vmatpush1.bf16.msra.mxu0 0
      %766 = vmatprep.subr.bf16.mxu0 0
      %767 = vmatpush1.bf16.msra.mxu0 0
      %768 = vmatprep.subr.bf16.mxu0 0
      %769 = vmatpush1.bf16.msra.mxu0 0
      %770 = vmatprep.subr.bf16.mxu0 0
      %771 = vmatpush1.bf16.msra.mxu0 0
      %772 = vmatprep.mubr.bf16.mxu0 0
      %773 = vmatmul.mubr.bf16.gmra.mrb[0].mxu0 %v688
      %v774 = vpop.f32.mrb[0].mxu0
      %v775 = vadd.f32 0.0, %v774
      %v776 = vpop.f32.mrb[0].mxu0
      %v777 = vpop.f32.mrb[0].mxu0
      %v778 = vpop.f32.mrb[0].mxu0
      %779 = vdwg.mxu0
      %v780 = vadd.f32 %v673, %v734
      %v781 = vadd.f32 %v674, %v736
      %v782 = vadd.f32 %v675, %v775
      %s783 = scalar_lea.vmem %s2, 10
      %v784 = vld [vmem:[%s783] sm:$0x3]
      %785 = vrot.lane.b32.xlu0 %v256, 108
      %v786 = vpop.permute.xlu0 %785
      %787 = vrot.lane.b32.xlu0 %v257, 108
      %v788 = vpop.permute.xlu0 %787
      %789 = vrot.lane.b32.xlu0 %v258, 108
      %v790 = vpop.permute.xlu0 %789
      %vm791 = vcmask 883712
      %v792 = vsel %vm791, %v786, %v788
      %v793 = vsel %vm791, %v788, %v790
      %v795 = vsel %vm274, %v784, 0
      %v798 = vsel %vm278, %v792, 0
      %v801 = vsel %vm278, %v793, 0
      %v804 = vsel %vm278, %v790, 0
      %806 = vmatprep.subr.bf16.mxu0 %v801
      %807 = vmatpush1.bf16.msra.mxu0 %v798
      %808 = vmatprep.subr.bf16.mxu0 0
      %809 = vmatpush1.bf16.msra.mxu0 0
      %810 = vmatprep.subr.bf16.mxu0 0
      %811 = vmatpush1.bf16.msra.mxu0 0
      %812 = vmatprep.subr.bf16.mxu0 0
      %813 = vmatpush1.bf16.msra.mxu0 0
      %814 = vmatprep.subr.bf16.mxu0 0
      %815 = vmatpush1.bf16.msra.mxu0 0
      %816 = vmatprep.subr.bf16.mxu0 0
      %817 = vmatpush1.bf16.msra.mxu0 0
      %818 = vmatprep.subr.bf16.mxu0 0
      %819 = vmatpush1.bf16.msra.mxu0 0
      %820 = vmatprep.subr.bf16.mxu0 0
      %821 = vmatpush1.bf16.msra.mxu0 0
      %822 = vmatprep.subr.bf16.mxu0 0
      %823 = vmatpush1.bf16.msra.mxu0 0
      %824 = vmatprep.subr.bf16.mxu0 0
      %825 = vmatpush1.bf16.msra.mxu0 0
      %826 = vmatprep.subr.bf16.mxu0 0
      %827 = vmatpush1.bf16.msra.mxu0 0
      %828 = vmatprep.subr.bf16.mxu0 0
      %829 = vmatpush1.bf16.msra.mxu0 0
      %830 = vmatprep.subr.bf16.mxu0 0
      %831 = vmatpush1.bf16.msra.mxu0 0
      %832 = vmatprep.subr.bf16.mxu0 0
      %833 = vmatpush1.bf16.msra.mxu0 0
      %834 = vmatprep.subr.bf16.mxu0 0
      %835 = vmatpush1.bf16.msra.mxu0 0
      %836 = vmatprep.subr.bf16.mxu0 0
      %837 = vmatpush1.bf16.msra.mxu0 0
      %838 = vmatprep.mubr.bf16.mxu0 0
      %839 = vmatmul.mubr.bf16.gmra.mrb[0].mxu0 %v795
      %v840 = vpop.f32.mrb[0].mxu0
      %v841 = vadd.f32 0.0, %v840
      %v842 = vpop.f32.mrb[0].mxu0
      %v843 = vadd.f32 0.0, %v842
      %v844 = vpop.f32.mrb[0].mxu0
      %v845 = vpop.f32.mrb[0].mxu0
      %846 = vdwg.mxu0
      %847 = vmatprep.subr.bf16.mxu0 0
      %848 = vmatpush1.bf16.msra.mxu0 %v804
      %849 = vmatprep.subr.bf16.mxu0 0
      %850 = vmatpush1.bf16.msra.mxu0 0
      %851 = vmatprep.subr.bf16.mxu0 0
      %852 = vmatpush1.bf16.msra.mxu0 0
      %853 = vmatprep.subr.bf16.mxu0 0
      %854 = vmatpush1.bf16.msra.mxu0 0
      %855 = vmatprep.subr.bf16.mxu0 0
      %856 = vmatpush1.bf16.msra.mxu0 0
      %857 = vmatprep.subr.bf16.mxu0 0
      %858 = vmatpush1.bf16.msra.mxu0 0
      %859 = vmatprep.subr.bf16.mxu0 0
      %860 = vmatpush1.bf16.msra.mxu0 0
      %861 = vmatprep.subr.bf16.mxu0 0
      %862 = vmatpush1.bf16.msra.mxu0 0
      %863 = vmatprep.subr.bf16.mxu0 0
      %864 = vmatpush1.bf16.msra.mxu0 0
      %865 = vmatprep.subr.bf16.mxu0 0
      %866 = vmatpush1.bf16.msra.mxu0 0
      %867 = vmatprep.subr.bf16.mxu0 0
      %868 = vmatpush1.bf16.msra.mxu0 0
      %869 = vmatprep.subr.bf16.mxu0 0
      %870 = vmatpush1.bf16.msra.mxu0 0
      %871 = vmatprep.subr.bf16.mxu0 0
      %872 = vmatpush1.bf16.msra.mxu0 0
      %873 = vmatprep.subr.bf16.mxu0 0
      %874 = vmatpush1.bf16.msra.mxu0 0
      %875 = vmatprep.subr.bf16.mxu0 0
      %876 = vmatpush1.bf16.msra.mxu0 0
      %877 = vmatprep.subr.bf16.mxu0 0
      %878 = vmatpush1.bf16.msra.mxu0 0
      %879 = vmatprep.mubr.bf16.mxu0 0
      %880 = vmatmul.mubr.bf16.gmra.mrb[0].mxu0 %v795
      %v881 = vpop.f32.mrb[0].mxu0
      %v882 = vadd.f32 0.0, %v881
      %v883 = vpop.f32.mrb[0].mxu0
      %v884 = vpop.f32.mrb[0].mxu0
      %v885 = vpop.f32.mrb[0].mxu0
      %886 = vdwg.mxu0
      %v887 = vadd.f32 %v780, %v841
      %v888 = vadd.f32 %v781, %v843
      %v889 = vadd.f32 %v782, %v882
      %s890 = scalar_lea.vmem %s2, 12
      %v891 = vld [vmem:[%s890] sm:$0x3]
      %892 = vrot.lane.b32.xlu0 %v256, 92
      %v893 = vpop.permute.xlu0 %892
      %894 = vrot.lane.b32.xlu0 %v257, 92
      %v895 = vpop.permute.xlu0 %894
      %896 = vrot.lane.b32.xlu0 %v258, 92
      %v897 = vpop.permute.xlu0 %896
      %vm898 = vcmask 752640
      %v899 = vsel %vm898, %v893, %v895
      %v900 = vsel %vm898, %v895, %v897
      %v902 = vsel %vm274, %v891, 0
      %v905 = vsel %vm278, %v899, 0
      %v908 = vsel %vm278, %v900, 0
      %v911 = vsel %vm278, %v897, 0
      %913 = vmatprep.subr.bf16.mxu0 %v908
      %914 = vmatpush1.bf16.msra.mxu0 %v905
      %915 = vmatprep.subr.bf16.mxu0 0
      %916 = vmatpush1.bf16.msra.mxu0 0
      %917 = vmatprep.subr.bf16.mxu0 0
      %918 = vmatpush1.bf16.msra.mxu0 0
      %919 = vmatprep.subr.bf16.mxu0 0
      %920 = vmatpush1.bf16.msra.mxu0 0
      %921 = vmatprep.subr.bf16.mxu0 0
      %922 = vmatpush1.bf16.msra.mxu0 0
      %923 = vmatprep.subr.bf16.mxu0 0
      %924 = vmatpush1.bf16.msra.mxu0 0
      %925 = vmatprep.subr.bf16.mxu0 0
      %926 = vmatpush1.bf16.msra.mxu0 0
      %927 = vmatprep.subr.bf16.mxu0 0
      %928 = vmatpush1.bf16.msra.mxu0 0
      %929 = vmatprep.subr.bf16.mxu0 0
      %930 = vmatpush1.bf16.msra.mxu0 0
      %931 = vmatprep.subr.bf16.mxu0 0
      %932 = vmatpush1.bf16.msra.mxu0 0
      %933 = vmatprep.subr.bf16.mxu0 0
      %934 = vmatpush1.bf16.msra.mxu0 0
      %935 = vmatprep.subr.bf16.mxu0 0
      %936 = vmatpush1.bf16.msra.mxu0 0
      %937 = vmatprep.subr.bf16.mxu0 0
      %938 = vmatpush1.bf16.msra.mxu0 0
      %939 = vmatprep.subr.bf16.mxu0 0
      %940 = vmatpush1.bf16.msra.mxu0 0
      %941 = vmatprep.subr.bf16.mxu0 0
      %942 = vmatpush1.bf16.msra.mxu0 0
      %943 = vmatprep.subr.bf16.mxu0 0
      %944 = vmatpush1.bf16.msra.mxu0 0
      %945 = vmatprep.mubr.bf16.mxu0 0
      %946 = vmatmul.mubr.bf16.gmra.mrb[0].mxu0 %v902
      %v947 = vpop.f32.mrb[0].mxu0
      %v948 = vadd.f32 0.0, %v947
      %v949 = vpop.f32.mrb[0].mxu0
      %v950 = vadd.f32 0.0, %v949
      %v951 = vpop.f32.mrb[0].mxu0
      %v952 = vpop.f32.mrb[0].mxu0
      %953 = vdwg.mxu0
      %954 = vmatprep.subr.bf16.mxu0 0
      %955 = vmatpush1.bf16.msra.mxu0 %v911
      %956 = vmatprep.subr.bf16.mxu0 0
      %957 = vmatpush1.bf16.msra.mxu0 0
      %958 = vmatprep.subr.bf16.mxu0 0
      %959 = vmatpush1.bf16.msra.mxu0 0
      %960 = vmatprep.subr.bf16.mxu0 0
      %961 = vmatpush1.bf16.msra.mxu0 0
      %962 = vmatprep.subr.bf16.mxu0 0
      %963 = vmatpush1.bf16.msra.mxu0 0
      %964 = vmatprep.subr.bf16.mxu0 0
      %965 = vmatpush1.bf16.msra.mxu0 0
      %966 = vmatprep.subr.bf16.mxu0 0
      %967 = vmatpush1.bf16.msra.mxu0 0
      %968 = vmatprep.subr.bf16.mxu0 0
      %969 = vmatpush1.bf16.msra.mxu0 0
      %970 = vmatprep.subr.bf16.mxu0 0
      %971 = vmatpush1.bf16.msra.mxu0 0
      %972 = vmatprep.subr.bf16.mxu0 0
      %973 = vmatpush1.bf16.msra.mxu0 0
      %974 = vmatprep.subr.bf16.mxu0 0
      %975 = vmatpush1.bf16.msra.mxu0 0
      %976 = vmatprep.subr.bf16.mxu0 0
      %977 = vmatpush1.bf16.msra.mxu0 0
      %978 = vmatprep.subr.bf16.mxu0 0
      %979 = vmatpush1.bf16.msra.mxu0 0
      %980 = vmatprep.subr.bf16.mxu0 0
      %981 = vmatpush1.bf16.msra.mxu0 0
      %982 = vmatprep.subr.bf16.mxu0 0
      %983 = vmatpush1.bf16.msra.mxu0 0
      %984 = vmatprep.subr.bf16.mxu0 0
      %985 = vmatpush1.bf16.msra.mxu0 0
      %986 = vmatprep.mubr.bf16.mxu0 0
      %987 = vmatmul.mubr.bf16.gmra.mrb[0].mxu0 %v902
      %v988 = vpop.f32.mrb[0].mxu0
      %v989 = vadd.f32 0.0, %v988
      %v990 = vpop.f32.mrb[0].mxu0
      %v991 = vpop.f32.mrb[0].mxu0
      %v992 = vpop.f32.mrb[0].mxu0
      %993 = vdwg.mxu0
      %v994 = vadd.f32 %v887, %v948
      %v995 = vadd.f32 %v888, %v950
      %v996 = vadd.f32 %v889, %v989
      %s997 = scalar_lea.vmem %s2, 14
      %v998 = vld [vmem:[%s997] sm:$0x3]
      %999 = vrot.lane.b32.xlu0 %v256, 91
      %v1000 = vpop.permute.xlu0 %999
      %1001 = vrot.lane.b32.xlu0 %v257, 91
      %v1002 = vpop.permute.xlu0 %1001
      %1003 = vrot.lane.b32.xlu0 %v258, 91
      %v1004 = vpop.permute.xlu0 %1003
      %vm1005 = vcmask 744448
      %v1006 = vsel %vm1005, %v1000, %v1002
      %v1007 = vsel %vm1005, %v1002, %v1004
      %v1009 = vsel %vm274, %v998, 0
      %v1012 = vsel %vm278, %v1006, 0
      %v1015 = vsel %vm278, %v1007, 0
      %v1018 = vsel %vm278, %v1004, 0
      %1020 = vmatprep.subr.bf16.mxu0 %v1015
      %1021 = vmatpush1.bf16.msra.mxu0 %v1012
      %1022 = vmatprep.subr.bf16.mxu0 0
      %1023 = vmatpush1.bf16.msra.mxu0 0
      %1024 = vmatprep.subr.bf16.mxu0 0
      %1025 = vmatpush1.bf16.msra.mxu0 0
      %1026 = vmatprep.subr.bf16.mxu0 0
      %1027 = vmatpush1.bf16.msra.mxu0 0
      %1028 = vmatprep.subr.bf16.mxu0 0
      %1029 = vmatpush1.bf16.msra.mxu0 0
      %1030 = vmatprep.subr.bf16.mxu0 0
      %1031 = vmatpush1.bf16.msra.mxu0 0
      %1032 = vmatprep.subr.bf16.mxu0 0
      %1033 = vmatpush1.bf16.msra.mxu0 0
      %1034 = vmatprep.subr.bf16.mxu0 0
      %1035 = vmatpush1.bf16.msra.mxu0 0
      %1036 = vmatprep.subr.bf16.mxu0 0
      %1037 = vmatpush1.bf16.msra.mxu0 0
      %1038 = vmatprep.subr.bf16.mxu0 0
      %1039 = vmatpush1.bf16.msra.mxu0 0
      %1040 = vmatprep.subr.bf16.mxu0 0
      %1041 = vmatpush1.bf16.msra.mxu0 0
      %1042 = vmatprep.subr.bf16.mxu0 0
      %1043 = vmatpush1.bf16.msra.mxu0 0
      %1044 = vmatprep.subr.bf16.mxu0 0
      %1045 = vmatpush1.bf16.msra.mxu0 0
      %1046 = vmatprep.subr.bf16.mxu0 0
      %1047 = vmatpush1.bf16.msra.mxu0 0
      %1048 = vmatprep.subr.bf16.mxu0 0
      %1049 = vmatpush1.bf16.msra.mxu0 0
      %1050 = vmatprep.subr.bf16.mxu0 0
      %1051 = vmatpush1.bf16.msra.mxu0 0
      %1052 = vmatprep.mubr.bf16.mxu0 0
      %1053 = vmatmul.mubr.bf16.gmra.mrb[0].mxu0 %v1009
      %v1054 = vpop.f32.mrb[0].mxu0
      %v1055 = vadd.f32 0.0, %v1054
      %v1056 = vpop.f32.mrb[0].mxu0
      %v1057 = vadd.f32 0.0, %v1056
      %v1058 = vpop.f32.mrb[0].mxu0
      %v1059 = vpop.f32.mrb[0].mxu0
      %1060 = vdwg.mxu0
      %1061 = vmatprep.subr.bf16.mxu0 0
      %1062 = vmatpush1.bf16.msra.mxu0 %v1018
      %1063 = vmatprep.subr.bf16.mxu0 0
      %1064 = vmatpush1.bf16.msra.mxu0 0
      %1065 = vmatprep.subr.bf16.mxu0 0
      %1066 = vmatpush1.bf16.msra.mxu0 0
      %1067 = vmatprep.subr.bf16.mxu0 0
      %1068 = vmatpush1.bf16.msra.mxu0 0
      %1069 = vmatprep.subr.bf16.mxu0 0
      %1070 = vmatpush1.bf16.msra.mxu0 0
      %1071 = vmatprep.subr.bf16.mxu0 0
      %1072 = vmatpush1.bf16.msra.mxu0 0
      %1073 = vmatprep.subr.bf16.mxu0 0
      %1074 = vmatpush1.bf16.msra.mxu0 0
      %1075 = vmatprep.subr.bf16.mxu0 0
      %1076 = vmatpush1.bf16.msra.mxu0 0
      %1077 = vmatprep.subr.bf16.mxu0 0
      %1078 = vmatpush1.bf16.msra.mxu0 0
      %1079 = vmatprep.subr.bf16.mxu0 0
      %1080 = vmatpush1.bf16.msra.mxu0 0
      %1081 = vmatprep.subr.bf16.mxu0 0
      %1082 = vmatpush1.bf16.msra.mxu0 0
      %1083 = vmatprep.subr.bf16.mxu0 0
      %1084 = vmatpush1.bf16.msra.mxu0 0
      %1085 = vmatprep.subr.bf16.mxu0 0
      %1086 = vmatpush1.bf16.msra.mxu0 0
      %1087 = vmatprep.subr.bf16.mxu0 0
      %1088 = vmatpush1.bf16.msra.mxu0 0
      %1089 = vmatprep.subr.bf16.mxu0 0
      %1090 = vmatpush1.bf16.msra.mxu0 0
      %1091 = vmatprep.subr.bf16.mxu0 0
      %1092 = vmatpush1.bf16.msra.mxu0 0
      %1093 = vmatprep.mubr.bf16.mxu0 0
      %1094 = vmatmul.mubr.bf16.gmra.mrb[0].mxu0 %v1009
      %v1095 = vpop.f32.mrb[0].mxu0
      %v1096 = vadd.f32 0.0, %v1095
      %v1097 = vpop.f32.mrb[0].mxu0
      %v1098 = vpop.f32.mrb[0].mxu0
      %v1099 = vpop.f32.mrb[0].mxu0
      %1100 = vdwg.mxu0
      %v1101 = vadd.f32 %v994, %v1055
      %v1102 = vadd.f32 %v995, %v1057
      %v1103 = vadd.f32 %v996, %v1096
      %s1104 = scalar_lea.vmem %s2, 16
      %v1105 = vld [vmem:[%s1104] sm:$0x3]
      %1106 = vrot.lane.b32.xlu0 %v256, 90
      %v1107 = vpop.permute.xlu0 %1106
      %1108 = vrot.lane.b32.xlu0 %v257, 90
      %v1109 = vpop.permute.xlu0 %1108
      %1110 = vrot.lane.b32.xlu0 %v258, 90
      %v1111 = vpop.permute.xlu0 %1110
      %vm1112 = vcmask 736256
      %v1113 = vsel %vm1112, %v1107, %v1109
      %v1114 = vsel %vm1112, %v1109, %v1111
      %v1116 = vsel %vm274, %v1105, 0
      %v1119 = vsel %vm278, %v1113, 0
      %v1122 = vsel %vm278, %v1114, 0
      %v1125 = vsel %vm278, %v1111, 0
      %1127 = vmatprep.subr.bf16.mxu0 %v1122
      %1128 = vmatpush1.bf16.msra.mxu0 %v1119
      %1129 = vmatprep.subr.bf16.mxu0 0
      %1130 = vmatpush1.bf16.msra.mxu0 0
      %1131 = vmatprep.subr.bf16.mxu0 0
      %1132 = vmatpush1.bf16.msra.mxu0 0
      %1133 = vmatprep.subr.bf16.mxu0 0
      %1134 = vmatpush1.bf16.msra.mxu0 0
      %1135 = vmatprep.subr.bf16.mxu0 0
      %1136 = vmatpush1.bf16.msra.mxu0 0
      %1137 = vmatprep.subr.bf16.mxu0 0
      %1138 = vmatpush1.bf16.msra.mxu0 0
      %1139 = vmatprep.subr.bf16.mxu0 0
      %1140 = vmatpush1.bf16.msra.mxu0 0
      %1141 = vmatprep.subr.bf16.mxu0 0
      %1142 = vmatpush1.bf16.msra.mxu0 0
      %1143 = vmatprep.subr.bf16.mxu0 0
      %1144 = vmatpush1.bf16.msra.mxu0 0
      %1145 = vmatprep.subr.bf16.mxu0 0
      %1146 = vmatpush1.bf16.msra.mxu0 0
      %1147 = vmatprep.subr.bf16.mxu0 0
      %1148 = vmatpush1.bf16.msra.mxu0 0
      %1149 = vmatprep.subr.bf16.mxu0 0
      %1150 = vmatpush1.bf16.msra.mxu0 0
      %1151 = vmatprep.subr.bf16.mxu0 0
      %1152 = vmatpush1.bf16.msra.mxu0 0
      %1153 = vmatprep.subr.bf16.mxu0 0
      %1154 = vmatpush1.bf16.msra.mxu0 0
      %1155 = vmatprep.subr.bf16.mxu0 0
      %1156 = vmatpush1.bf16.msra.mxu0 0
      %1157 = vmatprep.subr.bf16.mxu0 0
      %1158 = vmatpush1.bf16.msra.mxu0 0
      %1159 = vmatprep.mubr.bf16.mxu0 0
      %1160 = vmatmul.mubr.bf16.gmra.mrb[0].mxu0 %v1116
      %v1161 = vpop.f32.mrb[0].mxu0
      %v1162 = vadd.f32 0.0, %v1161
      %v1163 = vpop.f32.mrb[0].mxu0
      %v1164 = vadd.f32 0.0, %v1163
      %v1165 = vpop.f32.mrb[0].mxu0
      %v1166 = vpop.f32.mrb[0].mxu0
      %1167 = vdwg.mxu0
      %1168 = vmatprep.subr.bf16.mxu0 0
      %1169 = vmatpush1.bf16.msra.mxu0 %v1125
      %1170 = vmatprep.subr.bf16.mxu0 0
      %1171 = vmatpush1.bf16.msra.mxu0 0
      %1172 = vmatprep.subr.bf16.mxu0 0
      %1173 = vmatpush1.bf16.msra.mxu0 0
      %1174 = vmatprep.subr.bf16.mxu0 0
      %1175 = vmatpush1.bf16.msra.mxu0 0
      %1176 = vmatprep.subr.bf16.mxu0 0
      %1177 = vmatpush1.bf16.msra.mxu0 0
      %1178 = vmatprep.subr.bf16.mxu0 0
      %1179 = vmatpush1.bf16.msra.mxu0 0
      %1180 = vmatprep.subr.bf16.mxu0 0
      %1181 = vmatpush1.bf16.msra.mxu0 0
      %1182 = vmatprep.subr.bf16.mxu0 0
      %1183 = vmatpush1.bf16.msra.mxu0 0
      %1184 = vmatprep.subr.bf16.mxu0 0
      %1185 = vmatpush1.bf16.msra.mxu0 0
      %1186 = vmatprep.subr.bf16.mxu0 0
      %1187 = vmatpush1.bf16.msra.mxu0 0
      %1188 = vmatprep.subr.bf16.mxu0 0
      %1189 = vmatpush1.bf16.msra.mxu0 0
      %1190 = vmatprep.subr.bf16.mxu0 0
      %1191 = vmatpush1.bf16.msra.mxu0 0
      %1192 = vmatprep.subr.bf16.mxu0 0
      %1193 = vmatpush1.bf16.msra.mxu0 0
      %1194 = vmatprep.subr.bf16.mxu0 0
      %1195 = vmatpush1.bf16.msra.mxu0 0
      %1196 = vmatprep.subr.bf16.mxu0 0
      %1197 = vmatpush1.bf16.msra.mxu0 0
      %1198 = vmatprep.subr.bf16.mxu0 0
      %1199 = vmatpush1.bf16.msra.mxu0 0
      %1200 = vmatprep.mubr.bf16.mxu0 0
      %1201 = vmatmul.mubr.bf16.gmra.mrb[0].mxu0 %v1116
      %v1202 = vpop.f32.mrb[0].mxu0
      %v1203 = vadd.f32 0.0, %v1202
      %v1204 = vpop.f32.mrb[0].mxu0
      %v1205 = vpop.f32.mrb[0].mxu0
      %v1206 = vpop.f32.mrb[0].mxu0
      %1207 = vdwg.mxu0
      %v1208 = vadd.f32 %v1101, %v1162
      %v1209 = vadd.f32 %v1102, %v1164
      %v1210 = vadd.f32 %v1103, %v1203
      %v1211 = vld [vmem:[%s3] sm:$0xf]
      %1213 = vset.pattern.permute.xlu0 0
      %1214 = vperm.xlu0 %1213, %v1211
      %v1215 = vpop.permute.xlu0 %1214
      %v1217 = vadd.f32 %v1208, %v1215
      %v1218 = vadd.f32 %v1209, %v1215
      %v1219 = vadd.f32 %v1210, %v1215
      %v1220 = vmax.f32 %v1217, 0.0
      %v1221 = vmax.f32 %v1218, 0.0
      %v1222 = vmax.f32 %v1219, 0.0
      %v1223 = vld [vmem:[%s1] sm:$0x7]
      %v1225 = vlaneseq
      %v1226 = vshrl.u32 %v1225, 7
      %v1227 = vsub.s32 0, %v1226
      %v1228 = vrot.slane %v1223, %v1227
      %v1229 = vlaneseq
      %v1230 = vshrl.u32 %v1229, 7
      %v1231 = vsub.s32 1, %v1230
      %v1232 = vrot.slane %v1223, %v1231
      %v1233 = vlaneseq
      %v1234 = vshrl.u32 %v1233, 7
      %v1235 = vsub.s32 2, %v1234
      %v1236 = vrot.slane %v1223, %v1235
      %v1240 = vmul.f32 %v1220, %v1228
      %v1241 = vmul.f32 %v1221, %v1232
      %v1242 = vmul.f32 %v1222, %v1236
      %1243 = vst [vmem:[#allocation2] sm:$0xff] 0.0
      %vm1244 = vcmask 863232
      %1245 = vst.msk [vmem:[#allocation2 + $0x8] sm:$0xf] %vm1244, 0.0
      %v1249 = vcombine.low %v1240, %v1241
      %1250 = vrot.lane.b32.xlu0 %v1249, 19
      %v1251 = vpop.permute.xlu0 %1250
      %1252 = vrot.lane.b32.xlu0 %v1242, 19
      %v1253 = vpop.permute.xlu0 %1252
      %v1254 = vrot.slane %v1251, 4
      %vm1255 = vcmask 154624
      %v1256 = vsel %vm1255, %v1254, %v1251
      %v1257 = vsel %vm1255, %v1254, %v1253
      %vm1260 = vcmask 1043608
      %vm1261 = vcmask 1047556
      %vm1262 = vmor %vm1261, %vm1260
      %1263 = vst.msk [vmem:[#allocation2] sm:$0xff] %vm1262, %v1256
      %vm1264 = vcmask 707584
      %1265 = vst.msk [vmem:[#allocation2 + $0x8] sm:$0xf] %vm1264, %v1257
      %v1266 = vld [vmem:[#allocation2] sm:$0xff]
      %v1267 = vld [vmem:[#allocation2 + $0x8] sm:$0xf]
      %v1269 = vcombine.high %v1266, %v1266
      %v1271 = vpack.c.bf16 %v1266, %v1266
      %v1272 = vpack.c.bf16 %v1269, %v1269
      %v1273 = vpack.c.bf16 %v1267, %v1267
      %v1274 = vld [vmem:[%s4] sm:$0x3]
      %s1275 = scalar_lea.vmem %s4, 2
      %v1276 = vld [vmem:[%s1275] sm:$0x3]
      %1280 = vrot.lane.b32.xlu0 %v1271, 127
      %v1281 = vpop.permute.xlu0 %1280
      %1282 = vrot.lane.b32.xlu0 %v1272, 127
      %v1283 = vpop.permute.xlu0 %1282
      %1284 = vrot.lane.b32.xlu0 %v1273, 127
      %v1285 = vpop.permute.xlu0 %1284
      %v1286 = vsel %vm271, %v1281, %v1283
      %v1287 = vsel %vm271, %v1283, %v1285
      %vm1288 = vcmask 31744
      %v1290 = vsel %vm1288, %v1276, 0
      %vm1292 = vcmask 1041408
      %v1294 = vsel %vm1292, %v1286, 0
      %v1297 = vsel %vm1292, %v1287, 0
      %v1300 = vsel %vm1292, %v1285, 0
      %1302 = vmatprep.subr.bf16.mxu0 %v1297
      %1303 = vmatpush1.bf16.msra.mxu0 %v1294
      %1304 = vmatprep.subr.bf16.mxu0 0
      %1305 = vmatpush1.bf16.msra.mxu0 0
      %1306 = vmatprep.subr.bf16.mxu0 0
      %1307 = vmatpush1.bf16.msra.mxu0 0
      %1308 = vmatprep.subr.bf16.mxu0 0
      %1309 = vmatpush1.bf16.msra.mxu0 0
      %1310 = vmatprep.subr.bf16.mxu0 0
      %1311 = vmatpush1.bf16.msra.mxu0 0
      %1312 = vmatprep.subr.bf16.mxu0 0
      %1313 = vmatpush1.bf16.msra.mxu0 0
      %1314 = vmatprep.subr.bf16.mxu0 0
      %1315 = vmatpush1.bf16.msra.mxu0 0
      %1316 = vmatprep.subr.bf16.mxu0 0
      %1317 = vmatpush1.bf16.msra.mxu0 0
      %1318 = vmatprep.subr.bf16.mxu0 0
      %1319 = vmatpush1.bf16.msra.mxu0 0
      %1320 = vmatprep.subr.bf16.mxu0 0
      %1321 = vmatpush1.bf16.msra.mxu0 0
      %1322 = vmatprep.subr.bf16.mxu0 0
      %1323 = vmatpush1.bf16.msra.mxu0 0
      %1324 = vmatprep.subr.bf16.mxu0 0
      %1325 = vmatpush1.bf16.msra.mxu0 0
      %1326 = vmatprep.subr.bf16.mxu0 0
      %1327 = vmatpush1.bf16.msra.mxu0 0
      %1328 = vmatprep.subr.bf16.mxu0 0
      %1329 = vmatpush1.bf16.msra.mxu0 0
      %1330 = vmatprep.subr.bf16.mxu0 0
      %1331 = vmatpush1.bf16.msra.mxu0 0
      %1332 = vmatprep.subr.bf16.mxu0 0
      %1333 = vmatpush1.bf16.msra.mxu0 0
      %1334 = vmatprep.mubr.bf16.mxu0 0
      %1335 = vmatmul.mubr.bf16.gmra.mrb[0].mxu0 %v1290
      %v1336 = vpop.f32.mrb[0].mxu0
      %v1337 = vadd.f32 0.0, %v1336
      %v1338 = vpop.f32.mrb[0].mxu0
      %v1339 = vadd.f32 0.0, %v1338
      %v1340 = vpop.f32.mrb[0].mxu0
      %v1341 = vpop.f32.mrb[0].mxu0
      %1342 = vdwg.mxu0
      %1343 = vmatprep.subr.bf16.mxu0 0
      %1344 = vmatpush1.bf16.msra.mxu0 %v1300
      %1345 = vmatprep.subr.bf16.mxu0 0
      %1346 = vmatpush1.bf16.msra.mxu0 0
      %1347 = vmatprep.subr.bf16.mxu0 0
      %1348 = vmatpush1.bf16.msra.mxu0 0
      %1349 = vmatprep.subr.bf16.mxu0 0
      %1350 = vmatpush1.bf16.msra.mxu0 0
      %1351 = vmatprep.subr.bf16.mxu0 0
      %1352 = vmatpush1.bf16.msra.mxu0 0
      %1353 = vmatprep.subr.bf16.mxu0 0
      %1354 = vmatpush1.bf16.msra.mxu0 0
      %1355 = vmatprep.subr.bf16.mxu0 0
      %1356 = vmatpush1.bf16.msra.mxu0 0
      %1357 = vmatprep.subr.bf16.mxu0 0
      %1358 = vmatpush1.bf16.msra.mxu0 0
      %1359 = vmatprep.subr.bf16.mxu0 0
      %1360 = vmatpush1.bf16.msra.mxu0 0
      %1361 = vmatprep.subr.bf16.mxu0 0
      %1362 = vmatpush1.bf16.msra.mxu0 0
      %1363 = vmatprep.subr.bf16.mxu0 0
      %1364 = vmatpush1.bf16.msra.mxu0 0
      %1365 = vmatprep.subr.bf16.mxu0 0
      %1366 = vmatpush1.bf16.msra.mxu0 0
      %1367 = vmatprep.subr.bf16.mxu0 0
      %1368 = vmatpush1.bf16.msra.mxu0 0
      %1369 = vmatprep.subr.bf16.mxu0 0
      %1370 = vmatpush1.bf16.msra.mxu0 0
      %1371 = vmatprep.subr.bf16.mxu0 0
      %1372 = vmatpush1.bf16.msra.mxu0 0
      %1373 = vmatprep.subr.bf16.mxu0 0
      %1374 = vmatpush1.bf16.msra.mxu0 0
      %1375 = vmatprep.mubr.bf16.mxu0 0
      %1376 = vmatmul.mubr.bf16.gmra.mrb[0].mxu0 %v1290
      %v1377 = vpop.f32.mrb[0].mxu0
      %v1378 = vadd.f32 0.0, %v1377
      %v1379 = vpop.f32.mrb[0].mxu0
      %v1380 = vpop.f32.mrb[0].mxu0
      %v1381 = vpop.f32.mrb[0].mxu0
      %1382 = vdwg.mxu0
      %v1384 = vsel %vm1288, %v1274, 0
      %v1387 = vsel %vm1292, %v1271, 0
      %v1390 = vsel %vm1292, %v1272, 0
      %v1393 = vsel %vm1292, %v1273, 0
      %1395 = vmatprep.subr.bf16.mxu0 %v1390
      %1396 = vmatpush1.bf16.msra.mxu0 %v1387
      %1397 = vmatprep.subr.bf16.mxu0 0
      %1398 = vmatpush1.bf16.msra.mxu0 0
      %1399 = vmatprep.subr.bf16.mxu0 0
      %1400 = vmatpush1.bf16.msra.mxu0 0
      %1401 = vmatprep.subr.bf16.mxu0 0
      %1402 = vmatpush1.bf16.msra.mxu0 0
      %1403 = vmatprep.subr.bf16.mxu0 0
      %1404 = vmatpush1.bf16.msra.mxu0 0
      %1405 = vmatprep.subr.bf16.mxu0 0
      %1406 = vmatpush1.bf16.msra.mxu0 0
      %1407 = vmatprep.subr.bf16.mxu0 0
      %1408 = vmatpush1.bf16.msra.mxu0 0
      %1409 = vmatprep.subr.bf16.mxu0 0
      %1410 = vmatpush1.bf16.msra.mxu0 0
      %1411 = vmatprep.subr.bf16.mxu0 0
      %1412 = vmatpush1.bf16.msra.mxu0 0
      %1413 = vmatprep.subr.bf16.mxu0 0
      %1414 = vmatpush1.bf16.msra.mxu0 0
      %1415 = vmatprep.subr.bf16.mxu0 0
      %1416 = vmatpush1.bf16.msra.mxu0 0
      %1417 = vmatprep.subr.bf16.mxu0 0
      %1418 = vmatpush1.bf16.msra.mxu0 0
      %1419 = vmatprep.subr.bf16.mxu0 0
      %1420 = vmatpush1.bf16.msra.mxu0 0
      %1421 = vmatprep.subr.bf16.mxu0 0
      %1422 = vmatpush1.bf16.msra.mxu0 0
      %1423 = vmatprep.subr.bf16.mxu0 0
      %1424 = vmatpush1.bf16.msra.mxu0 0
      %1425 = vmatprep.subr.bf16.mxu0 0
      %1426 = vmatpush1.bf16.msra.mxu0 0
      %1427 = vmatprep.mubr.bf16.mxu0 0
      %1428 = vmatmul.mubr.bf16.gmra.mrb[0].mxu0 %v1384
      %v1429 = vpop.f32.mrb[0].mxu0
      %v1430 = vadd.f32 %v1337, %v1429
      %v1431 = vpop.f32.mrb[0].mxu0
      %v1432 = vadd.f32 %v1339, %v1431
      %v1433 = vpop.f32.mrb[0].mxu0
      %v1434 = vpop.f32.mrb[0].mxu0
      %1435 = vdwg.mxu0
      %1436 = vmatprep.subr.bf16.mxu0 0
      %1437 = vmatpush1.bf16.msra.mxu0 %v1393
      %1438 = vmatprep.subr.bf16.mxu0 0
      %1439 = vmatpush1.bf16.msra.mxu0 0
      %1440 = vmatprep.subr.bf16.mxu0 0
      %1441 = vmatpush1.bf16.msra.mxu0 0
      %1442 = vmatprep.subr.bf16.mxu0 0
      %1443 = vmatpush1.bf16.msra.mxu0 0
      %1444 = vmatprep.subr.bf16.mxu0 0
      %1445 = vmatpush1.bf16.msra.mxu0 0
      %1446 = vmatprep.subr.bf16.mxu0 0
      %1447 = vmatpush1.bf16.msra.mxu0 0
      %1448 = vmatprep.subr.bf16.mxu0 0
      %1449 = vmatpush1.bf16.msra.mxu0 0
      %1450 = vmatprep.subr.bf16.mxu0 0
      %1451 = vmatpush1.bf16.msra.mxu0 0
      %1452 = vmatprep.subr.bf16.mxu0 0
      %1453 = vmatpush1.bf16.msra.mxu0 0
      %1454 = vmatprep.subr.bf16.mxu0 0
      %1455 = vmatpush1.bf16.msra.mxu0 0
      %1456 = vmatprep.subr.bf16.mxu0 0
      %1457 = vmatpush1.bf16.msra.mxu0 0
      %1458 = vmatprep.subr.bf16.mxu0 0
      %1459 = vmatpush1.bf16.msra.mxu0 0
      %1460 = vmatprep.subr.bf16.mxu0 0
      %1461 = vmatpush1.bf16.msra.mxu0 0
      %1462 = vmatprep.subr.bf16.mxu0 0
      %1463 = vmatpush1.bf16.msra.mxu0 0
      %1464 = vmatprep.subr.bf16.mxu0 0
      %1465 = vmatpush1.bf16.msra.mxu0 0
      %1466 = vmatprep.subr.bf16.mxu0 0
      %1467 = vmatpush1.bf16.msra.mxu0 0
      %1468 = vmatprep.mubr.bf16.mxu0 0
      %1469 = vmatmul.mubr.bf16.gmra.mrb[0].mxu0 %v1384
      %v1470 = vpop.f32.mrb[0].mxu0
      %v1471 = vadd.f32 %v1378, %v1470
      %v1472 = vpop.f32.mrb[0].mxu0
      %v1473 = vpop.f32.mrb[0].mxu0
      %v1474 = vpop.f32.mrb[0].mxu0
      %1475 = vdwg.mxu0
      %v1476 = vld [vmem:[#allocation2] sm:$0xff]
      %v1477 = vld [vmem:[#allocation2 + $0x8] sm:$0xf]
      %v1479 = vcombine.high %v1476, %v1476
      %v1481 = vpack.c.bf16 %v1476, %v1476
      %v1482 = vpack.c.bf16 %v1479, %v1479
      %v1483 = vpack.c.bf16 %v1477, %v1477
      %s1484 = scalar_lea.vmem %s4, 4
      %v1485 = vld [vmem:[%s1484] sm:$0x3]
      %1489 = vrot.lane.b32.xlu0 %v1481, 126
      %v1490 = vpop.permute.xlu0 %1489
      %1491 = vrot.lane.b32.xlu0 %v1482, 126
      %v1492 = vpop.permute.xlu0 %1491
      %1493 = vrot.lane.b32.xlu0 %v1483, 126
      %v1494 = vpop.permute.xlu0 %1493
      %v1495 = vsel %vm470, %v1490, %v1492
      %v1496 = vsel %vm470, %v1492, %v1494
      %v1498 = vsel %vm1288, %v1485, 0
      %v1501 = vsel %vm1292, %v1495, 0
      %v1504 = vsel %vm1292, %v1496, 0
      %v1507 = vsel %vm1292, %v1494, 0
      %1509 = vmatprep.subr.bf16.mxu0 %v1504
      %1510 = vmatpush1.bf16.msra.mxu0 %v1501
      %1511 = vmatprep.subr.bf16.mxu0 0
      %1512 = vmatpush1.bf16.msra.mxu0 0
      %1513 = vmatprep.subr.bf16.mxu0 0
      %1514 = vmatpush1.bf16.msra.mxu0 0
      %1515 = vmatprep.subr.bf16.mxu0 0
      %1516 = vmatpush1.bf16.msra.mxu0 0
      %1517 = vmatprep.subr.bf16.mxu0 0
      %1518 = vmatpush1.bf16.msra.mxu0 0
      %1519 = vmatprep.subr.bf16.mxu0 0
      %1520 = vmatpush1.bf16.msra.mxu0 0
      %1521 = vmatprep.subr.bf16.mxu0 0
      %1522 = vmatpush1.bf16.msra.mxu0 0
      %1523 = vmatprep.subr.bf16.mxu0 0
      %1524 = vmatpush1.bf16.msra.mxu0 0
      %1525 = vmatprep.subr.bf16.mxu0 0
      %1526 = vmatpush1.bf16.msra.mxu0 0
      %1527 = vmatprep.subr.bf16.mxu0 0
      %1528 = vmatpush1.bf16.msra.mxu0 0
      %1529 = vmatprep.subr.bf16.mxu0 0
      %1530 = vmatpush1.bf16.msra.mxu0 0
      %1531 = vmatprep.subr.bf16.mxu0 0
      %1532 = vmatpush1.bf16.msra.mxu0 0
      %1533 = vmatprep.subr.bf16.mxu0 0
      %1534 = vmatpush1.bf16.msra.mxu0 0
      %1535 = vmatprep.subr.bf16.mxu0 0
      %1536 = vmatpush1.bf16.msra.mxu0 0
      %1537 = vmatprep.subr.bf16.mxu0 0
      %1538 = vmatpush1.bf16.msra.mxu0 0
      %1539 = vmatprep.subr.bf16.mxu0 0
      %1540 = vmatpush1.bf16.msra.mxu0 0
      %1541 = vmatprep.mubr.bf16.mxu0 0
      %1542 = vmatmul.mubr.bf16.gmra.mrb[0].mxu0 %v1498
      %v1543 = vpop.f32.mrb[0].mxu0
      %v1544 = vadd.f32 0.0, %v1543
      %v1545 = vpop.f32.mrb[0].mxu0
      %v1546 = vadd.f32 0.0, %v1545
      %v1547 = vpop.f32.mrb[0].mxu0
      %v1548 = vpop.f32.mrb[0].mxu0
      %1549 = vdwg.mxu0
      %1550 = vmatprep.subr.bf16.mxu0 0
      %1551 = vmatpush1.bf16.msra.mxu0 %v1507
      %1552 = vmatprep.subr.bf16.mxu0 0
      %1553 = vmatpush1.bf16.msra.mxu0 0
      %1554 = vmatprep.subr.bf16.mxu0 0
      %1555 = vmatpush1.bf16.msra.mxu0 0
      %1556 = vmatprep.subr.bf16.mxu0 0
      %1557 = vmatpush1.bf16.msra.mxu0 0
      %1558 = vmatprep.subr.bf16.mxu0 0
      %1559 = vmatpush1.bf16.msra.mxu0 0
      %1560 = vmatprep.subr.bf16.mxu0 0
      %1561 = vmatpush1.bf16.msra.mxu0 0
      %1562 = vmatprep.subr.bf16.mxu0 0
      %1563 = vmatpush1.bf16.msra.mxu0 0
      %1564 = vmatprep.subr.bf16.mxu0 0
      %1565 = vmatpush1.bf16.msra.mxu0 0
      %1566 = vmatprep.subr.bf16.mxu0 0
      %1567 = vmatpush1.bf16.msra.mxu0 0
      %1568 = vmatprep.subr.bf16.mxu0 0
      %1569 = vmatpush1.bf16.msra.mxu0 0
      %1570 = vmatprep.subr.bf16.mxu0 0
      %1571 = vmatpush1.bf16.msra.mxu0 0
      %1572 = vmatprep.subr.bf16.mxu0 0
      %1573 = vmatpush1.bf16.msra.mxu0 0
      %1574 = vmatprep.subr.bf16.mxu0 0
      %1575 = vmatpush1.bf16.msra.mxu0 0
      %1576 = vmatprep.subr.bf16.mxu0 0
      %1577 = vmatpush1.bf16.msra.mxu0 0
      %1578 = vmatprep.subr.bf16.mxu0 0
      %1579 = vmatpush1.bf16.msra.mxu0 0
      %1580 = vmatprep.subr.bf16.mxu0 0
      %1581 = vmatpush1.bf16.msra.mxu0 0
      %1582 = vmatprep.mubr.bf16.mxu0 0
      %1583 = vmatmul.mubr.bf16.gmra.mrb[0].mxu0 %v1498
      %v1584 = vpop.f32.mrb[0].mxu0
      %v1585 = vadd.f32 0.0, %v1584
      %v1586 = vpop.f32.mrb[0].mxu0
      %v1587 = vpop.f32.mrb[0].mxu0
      %v1588 = vpop.f32.mrb[0].mxu0
      %1589 = vdwg.mxu0
      %v1590 = vadd.f32 %v1430, %v1544
      %v1591 = vadd.f32 %v1432, %v1546
      %v1592 = vadd.f32 %v1471, %v1585
      %v1593 = vld [vmem:[#allocation2] sm:$0xff]
      %v1594 = vld [vmem:[#allocation2 + $0x8] sm:$0xf]
      %v1596 = vcombine.high %v1593, %v1593
      %v1598 = vpack.c.bf16 %v1593, %v1593
      %v1599 = vpack.c.bf16 %v1596, %v1596
      %v1600 = vpack.c.bf16 %v1594, %v1594
      %s1601 = scalar_lea.vmem %s4, 6
      %v1602 = vld [vmem:[%s1601] sm:$0x3]
      %1606 = vrot.lane.b32.xlu0 %v1598, 110
      %v1607 = vpop.permute.xlu0 %1606
      %1608 = vrot.lane.b32.xlu0 %v1599, 110
      %v1609 = vpop.permute.xlu0 %1608
      %1610 = vrot.lane.b32.xlu0 %v1600, 110
      %v1611 = vpop.permute.xlu0 %1610
      %v1612 = vsel %vm577, %v1607, %v1609
      %v1613 = vsel %vm577, %v1609, %v1611
      %v1615 = vsel %vm1288, %v1602, 0
      %v1618 = vsel %vm1292, %v1612, 0
      %v1621 = vsel %vm1292, %v1613, 0
      %v1624 = vsel %vm1292, %v1611, 0
      %1626 = vmatprep.subr.bf16.mxu0 %v1621
      %1627 = vmatpush1.bf16.msra.mxu0 %v1618
      %1628 = vmatprep.subr.bf16.mxu0 0
      %1629 = vmatpush1.bf16.msra.mxu0 0
      %1630 = vmatprep.subr.bf16.mxu0 0
      %1631 = vmatpush1.bf16.msra.mxu0 0
      %1632 = vmatprep.subr.bf16.mxu0 0
      %1633 = vmatpush1.bf16.msra.mxu0 0
      %1634 = vmatprep.subr.bf16.mxu0 0
      %1635 = vmatpush1.bf16.msra.mxu0 0
      %1636 = vmatprep.subr.bf16.mxu0 0
      %1637 = vmatpush1.bf16.msra.mxu0 0
      %1638 = vmatprep.subr.bf16.mxu0 0
      %1639 = vmatpush1.bf16.msra.mxu0 0
      %1640 = vmatprep.subr.bf16.mxu0 0
      %1641 = vmatpush1.bf16.msra.mxu0 0
      %1642 = vmatprep.subr.bf16.mxu0 0
      %1643 = vmatpush1.bf16.msra.mxu0 0
      %1644 = vmatprep.subr.bf16.mxu0 0
      %1645 = vmatpush1.bf16.msra.mxu0 0
      %1646 = vmatprep.subr.bf16.mxu0 0
      %1647 = vmatpush1.bf16.msra.mxu0 0
      %1648 = vmatprep.subr.bf16.mxu0 0
      %1649 = vmatpush1.bf16.msra.mxu0 0
      %1650 = vmatprep.subr.bf16.mxu0 0
      %1651 = vmatpush1.bf16.msra.mxu0 0
      %1652 = vmatprep.subr.bf16.mxu0 0
      %1653 = vmatpush1.bf16.msra.mxu0 0
      %1654 = vmatprep.subr.bf16.mxu0 0
      %1655 = vmatpush1.bf16.msra.mxu0 0
      %1656 = vmatprep.subr.bf16.mxu0 0
      %1657 = vmatpush1.bf16.msra.mxu0 0
      %1658 = vmatprep.mubr.bf16.mxu0 0
      %1659 = vmatmul.mubr.bf16.gmra.mrb[0].mxu0 %v1615
      %v1660 = vpop.f32.mrb[0].mxu0
      %v1661 = vadd.f32 0.0, %v1660
      %v1662 = vpop.f32.mrb[0].mxu0
      %v1663 = vadd.f32 0.0, %v1662
      %v1664 = vpop.f32.mrb[0].mxu0
      %v1665 = vpop.f32.mrb[0].mxu0
      %1666 = vdwg.mxu0
      %1667 = vmatprep.subr.bf16.mxu0 0
      %1668 = vmatpush1.bf16.msra.mxu0 %v1624
      %1669 = vmatprep.subr.bf16.mxu0 0
      %1670 = vmatpush1.bf16.msra.mxu0 0
      %1671 = vmatprep.subr.bf16.mxu0 0
      %1672 = vmatpush1.bf16.msra.mxu0 0
      %1673 = vmatprep.subr.bf16.mxu0 0
      %1674 = vmatpush1.bf16.msra.mxu0 0
      %1675 = vmatprep.subr.bf16.mxu0 0
      %1676 = vmatpush1.bf16.msra.mxu0 0
      %1677 = vmatprep.subr.bf16.mxu0 0
      %1678 = vmatpush1.bf16.msra.mxu0 0
      %1679 = vmatprep.subr.bf16.mxu0 0
      %1680 = vmatpush1.bf16.msra.mxu0 0
      %1681 = vmatprep.subr.bf16.mxu0 0
      %1682 = vmatpush1.bf16.msra.mxu0 0
      %1683 = vmatprep.subr.bf16.mxu0 0
      %1684 = vmatpush1.bf16.msra.mxu0 0
      %1685 = vmatprep.subr.bf16.mxu0 0
      %1686 = vmatpush1.bf16.msra.mxu0 0
      %1687 = vmatprep.subr.bf16.mxu0 0
      %1688 = vmatpush1.bf16.msra.mxu0 0
      %1689 = vmatprep.subr.bf16.mxu0 0
      %1690 = vmatpush1.bf16.msra.mxu0 0
      %1691 = vmatprep.subr.bf16.mxu0 0
      %1692 = vmatpush1.bf16.msra.mxu0 0
      %1693 = vmatprep.subr.bf16.mxu0 0
      %1694 = vmatpush1.bf16.msra.mxu0 0
      %1695 = vmatprep.subr.bf16.mxu0 0
      %1696 = vmatpush1.bf16.msra.mxu0 0
      %1697 = vmatprep.subr.bf16.mxu0 0
      %1698 = vmatpush1.bf16.msra.mxu0 0
      %1699 = vmatprep.mubr.bf16.mxu0 0
      %1700 = vmatmul.mubr.bf16.gmra.mrb[0].mxu0 %v1615
      %v1701 = vpop.f32.mrb[0].mxu0
      %v1702 = vadd.f32 0.0, %v1701
      %v1703 = vpop.f32.mrb[0].mxu0
      %v1704 = vpop.f32.mrb[0].mxu0
      %v1705 = vpop.f32.mrb[0].mxu0
      %1706 = vdwg.mxu0
      %v1707 = vadd.f32 %v1590, %v1661
      %v1708 = vadd.f32 %v1591, %v1663
      %v1709 = vadd.f32 %v1592, %v1702
      %v1710 = vld [vmem:[#allocation2] sm:$0xff]
      %v1711 = vld [vmem:[#allocation2 + $0x8] sm:$0xf]
      %v1713 = vcombine.high %v1710, %v1710
      %v1715 = vpack.c.bf16 %v1710, %v1710
      %v1716 = vpack.c.bf16 %v1713, %v1713
      %v1717 = vpack.c.bf16 %v1711, %v1711
      %s1718 = scalar_lea.vmem %s4, 8
      %v1719 = vld [vmem:[%s1718] sm:$0x3]
      %1723 = vrot.lane.b32.xlu0 %v1715, 109
      %v1724 = vpop.permute.xlu0 %1723
      %1725 = vrot.lane.b32.xlu0 %v1716, 109
      %v1726 = vpop.permute.xlu0 %1725
      %1727 = vrot.lane.b32.xlu0 %v1717, 109
      %v1728 = vpop.permute.xlu0 %1727
      %v1729 = vsel %vm684, %v1724, %v1726
      %v1730 = vsel %vm684, %v1726, %v1728
      %v1732 = vsel %vm1288, %v1719, 0
      %v1735 = vsel %vm1292, %v1729, 0
      %v1738 = vsel %vm1292, %v1730, 0
      %v1741 = vsel %vm1292, %v1728, 0
      %1743 = vmatprep.subr.bf16.mxu0 %v1738
      %1744 = vmatpush1.bf16.msra.mxu0 %v1735
      %1745 = vmatprep.subr.bf16.mxu0 0
      %1746 = vmatpush1.bf16.msra.mxu0 0
      %1747 = vmatprep.subr.bf16.mxu0 0
      %1748 = vmatpush1.bf16.msra.mxu0 0
      %1749 = vmatprep.subr.bf16.mxu0 0
      %1750 = vmatpush1.bf16.msra.mxu0 0
      %1751 = vmatprep.subr.bf16.mxu0 0
      %1752 = vmatpush1.bf16.msra.mxu0 0
      %1753 = vmatprep.subr.bf16.mxu0 0
      %1754 = vmatpush1.bf16.msra.mxu0 0
      %1755 = vmatprep.subr.bf16.mxu0 0
      %1756 = vmatpush1.bf16.msra.mxu0 0
      %1757 = vmatprep.subr.bf16.mxu0 0
      %1758 = vmatpush1.bf16.msra.mxu0 0
      %1759 = vmatprep.subr.bf16.mxu0 0
      %1760 = vmatpush1.bf16.msra.mxu0 0
      %1761 = vmatprep.subr.bf16.mxu0 0
      %1762 = vmatpush1.bf16.msra.mxu0 0
      %1763 = vmatprep.subr.bf16.mxu0 0
      %1764 = vmatpush1.bf16.msra.mxu0 0
      %1765 = vmatprep.subr.bf16.mxu0 0
      %1766 = vmatpush1.bf16.msra.mxu0 0
      %1767 = vmatprep.subr.bf16.mxu0 0
      %1768 = vmatpush1.bf16.msra.mxu0 0
      %1769 = vmatprep.subr.bf16.mxu0 0
      %1770 = vmatpush1.bf16.msra.mxu0 0
      %1771 = vmatprep.subr.bf16.mxu0 0
      %1772 = vmatpush1.bf16.msra.mxu0 0
      %1773 = vmatprep.subr.bf16.mxu0 0
      %1774 = vmatpush1.bf16.msra.mxu0 0
      %1775 = vmatprep.mubr.bf16.mxu0 0
      %1776 = vmatmul.mubr.bf16.gmra.mrb[0].mxu0 %v1732
      %v1777 = vpop.f32.mrb[0].mxu0
      %v1778 = vadd.f32 0.0, %v1777
      %v1779 = vpop.f32.mrb[0].mxu0
      %v1780 = vadd.f32 0.0, %v1779
      %v1781 = vpop.f32.mrb[0].mxu0
      %v1782 = vpop.f32.mrb[0].mxu0
      %1783 = vdwg.mxu0
      %1784 = vmatprep.subr.bf16.mxu0 0
      %1785 = vmatpush1.bf16.msra.mxu0 %v1741
      %1786 = vmatprep.subr.bf16.mxu0 0
      %1787 = vmatpush1.bf16.msra.mxu0 0
      %1788 = vmatprep.subr.bf16.mxu0 0
      %1789 = vmatpush1.bf16.msra.mxu0 0
      %1790 = vmatprep.subr.bf16.mxu0 0
      %1791 = vmatpush1.bf16.msra.mxu0 0
      %1792 = vmatprep.subr.bf16.mxu0 0
      %1793 = vmatpush1.bf16.msra.mxu0 0
      %1794 = vmatprep.subr.bf16.mxu0 0
      %1795 = vmatpush1.bf16.msra.mxu0 0
      %1796 = vmatprep.subr.bf16.mxu0 0
      %1797 = vmatpush1.bf16.msra.mxu0 0
      %1798 = vmatprep.subr.bf16.mxu0 0
      %1799 = vmatpush1.bf16.msra.mxu0 0
      %1800 = vmatprep.subr.bf16.mxu0 0
      %1801 = vmatpush1.bf16.msra.mxu0 0
      %1802 = vmatprep.subr.bf16.mxu0 0
      %1803 = vmatpush1.bf16.msra.mxu0 0
      %1804 = vmatprep.subr.bf16.mxu0 0
      %1805 = vmatpush1.bf16.msra.mxu0 0
      %1806 = vmatprep.subr.bf16.mxu0 0
      %1807 = vmatpush1.bf16.msra.mxu0 0
      %1808 = vmatprep.subr.bf16.mxu0 0
      %1809 = vmatpush1.bf16.msra.mxu0 0
      %1810 = vmatprep.subr.bf16.mxu0 0
      %1811 = vmatpush1.bf16.msra.mxu0 0
      %1812 = vmatprep.subr.bf16.mxu0 0
      %1813 = vmatpush1.bf16.msra.mxu0 0
      %1814 = vmatprep.subr.bf16.mxu0 0
      %1815 = vmatpush1.bf16.msra.mxu0 0
      %1816 = vmatprep.mubr.bf16.mxu0 0
      %1817 = vmatmul.mubr.bf16.gmra.mrb[0].mxu0 %v1732
      %v1818 = vpop.f32.mrb[0].mxu0
      %v1819 = vadd.f32 0.0, %v1818
      %v1820 = vpop.f32.mrb[0].mxu0
      %v1821 = vpop.f32.mrb[0].mxu0
      %v1822 = vpop.f32.mrb[0].mxu0
      %1823 = vdwg.mxu0
      %v1824 = vadd.f32 %v1707, %v1778
      %v1825 = vadd.f32 %v1708, %v1780
      %v1826 = vadd.f32 %v1709, %v1819
      %v1827 = vld [vmem:[#allocation2] sm:$0xff]
      %v1828 = vld [vmem:[#allocation2 + $0x8] sm:$0xf]
      %v1830 = vcombine.high %v1827, %v1827
      %v1832 = vpack.c.bf16 %v1827, %v1827
      %v1833 = vpack.c.bf16 %v1830, %v1830
      %v1834 = vpack.c.bf16 %v1828, %v1828
      %s1835 = scalar_lea.vmem %s4, 10
      %v1836 = vld [vmem:[%s1835] sm:$0x3]
      %1840 = vrot.lane.b32.xlu0 %v1832, 108
      %v1841 = vpop.permute.xlu0 %1840
      %1842 = vrot.lane.b32.xlu0 %v1833, 108
      %v1843 = vpop.permute.xlu0 %1842
      %1844 = vrot.lane.b32.xlu0 %v1834, 108
      %v1845 = vpop.permute.xlu0 %1844
      %v1846 = vsel %vm791, %v1841, %v1843
      %v1847 = vsel %vm791, %v1843, %v1845
      %v1849 = vsel %vm1288, %v1836, 0
      %v1852 = vsel %vm1292, %v1846, 0
      %v1855 = vsel %vm1292, %v1847, 0
      %v1858 = vsel %vm1292, %v1845, 0
      %1860 = vmatprep.subr.bf16.mxu0 %v1855
      %1861 = vmatpush1.bf16.msra.mxu0 %v1852
      %1862 = vmatprep.subr.bf16.mxu0 0
      %1863 = vmatpush1.bf16.msra.mxu0 0
      %1864 = vmatprep.subr.bf16.mxu0 0
      %1865 = vmatpush1.bf16.msra.mxu0 0
      %1866 = vmatprep.subr.bf16.mxu0 0
      %1867 = vmatpush1.bf16.msra.mxu0 0
      %1868 = vmatprep.subr.bf16.mxu0 0
      %1869 = vmatpush1.bf16.msra.mxu0 0
      %1870 = vmatprep.subr.bf16.mxu0 0
      %1871 = vmatpush1.bf16.msra.mxu0 0
      %1872 = vmatprep.subr.bf16.mxu0 0
      %1873 = vmatpush1.bf16.msra.mxu0 0
      %1874 = vmatprep.subr.bf16.mxu0 0
      %1875 = vmatpush1.bf16.msra.mxu0 0
      %1876 = vmatprep.subr.bf16.mxu0 0
      %1877 = vmatpush1.bf16.msra.mxu0 0
      %1878 = vmatprep.subr.bf16.mxu0 0
      %1879 = vmatpush1.bf16.msra.mxu0 0
      %1880 = vmatprep.subr.bf16.mxu0 0
      %1881 = vmatpush1.bf16.msra.mxu0 0
      %1882 = vmatprep.subr.bf16.mxu0 0
      %1883 = vmatpush1.bf16.msra.mxu0 0
      %1884 = vmatprep.subr.bf16.mxu0 0
      %1885 = vmatpush1.bf16.msra.mxu0 0
      %1886 = vmatprep.subr.bf16.mxu0 0
      %1887 = vmatpush1.bf16.msra.mxu0 0
      %1888 = vmatprep.subr.bf16.mxu0 0
      %1889 = vmatpush1.bf16.msra.mxu0 0
      %1890 = vmatprep.subr.bf16.mxu0 0
      %1891 = vmatpush1.bf16.msra.mxu0 0
      %1892 = vmatprep.mubr.bf16.mxu0 0
      %1893 = vmatmul.mubr.bf16.gmra.mrb[0].mxu0 %v1849
      %v1894 = vpop.f32.mrb[0].mxu0
      %v1895 = vadd.f32 0.0, %v1894
      %v1896 = vpop.f32.mrb[0].mxu0
      %v1897 = vadd.f32 0.0, %v1896
      %v1898 = vpop.f32.mrb[0].mxu0
      %v1899 = vpop.f32.mrb[0].mxu0
      %1900 = vdwg.mxu0
      %1901 = vmatprep.subr.bf16.mxu0 0
      %1902 = vmatpush1.bf16.msra.mxu0 %v1858
      %1903 = vmatprep.subr.bf16.mxu0 0
      %1904 = vmatpush1.bf16.msra.mxu0 0
      %1905 = vmatprep.subr.bf16.mxu0 0
      %1906 = vmatpush1.bf16.msra.mxu0 0
      %1907 = vmatprep.subr.bf16.mxu0 0
      %1908 = vmatpush1.bf16.msra.mxu0 0
      %1909 = vmatprep.subr.bf16.mxu0 0
      %1910 = vmatpush1.bf16.msra.mxu0 0
      %1911 = vmatprep.subr.bf16.mxu0 0
      %1912 = vmatpush1.bf16.msra.mxu0 0
      %1913 = vmatprep.subr.bf16.mxu0 0
      %1914 = vmatpush1.bf16.msra.mxu0 0
      %1915 = vmatprep.subr.bf16.mxu0 0
      %1916 = vmatpush1.bf16.msra.mxu0 0
      %1917 = vmatprep.subr.bf16.mxu0 0
      %1918 = vmatpush1.bf16.msra.mxu0 0
      %1919 = vmatprep.subr.bf16.mxu0 0
      %1920 = vmatpush1.bf16.msra.mxu0 0
      %1921 = vmatprep.subr.bf16.mxu0 0
      %1922 = vmatpush1.bf16.msra.mxu0 0
      %1923 = vmatprep.subr.bf16.mxu0 0
      %1924 = vmatpush1.bf16.msra.mxu0 0
      %1925 = vmatprep.subr.bf16.mxu0 0
      %1926 = vmatpush1.bf16.msra.mxu0 0
      %1927 = vmatprep.subr.bf16.mxu0 0
      %1928 = vmatpush1.bf16.msra.mxu0 0
      %1929 = vmatprep.subr.bf16.mxu0 0
      %1930 = vmatpush1.bf16.msra.mxu0 0
      %1931 = vmatprep.subr.bf16.mxu0 0
      %1932 = vmatpush1.bf16.msra.mxu0 0
      %1933 = vmatprep.mubr.bf16.mxu0 0
      %1934 = vmatmul.mubr.bf16.gmra.mrb[0].mxu0 %v1849
      %v1935 = vpop.f32.mrb[0].mxu0
      %v1936 = vadd.f32 0.0, %v1935
      %v1937 = vpop.f32.mrb[0].mxu0
      %v1938 = vpop.f32.mrb[0].mxu0
      %v1939 = vpop.f32.mrb[0].mxu0
      %1940 = vdwg.mxu0
      %v1941 = vadd.f32 %v1824, %v1895
      %v1942 = vadd.f32 %v1825, %v1897
      %v1943 = vadd.f32 %v1826, %v1936
      %v1944 = vld [vmem:[#allocation2] sm:$0xff]
      %v1945 = vld [vmem:[#allocation2 + $0x8] sm:$0xf]
      %v1947 = vcombine.high %v1944, %v1944
      %v1949 = vpack.c.bf16 %v1944, %v1944
      %v1950 = vpack.c.bf16 %v1947, %v1947
      %v1951 = vpack.c.bf16 %v1945, %v1945
      %s1952 = scalar_lea.vmem %s4, 12
      %v1953 = vld [vmem:[%s1952] sm:$0x3]
      %1957 = vrot.lane.b32.xlu0 %v1949, 92
      %v1958 = vpop.permute.xlu0 %1957
      %1959 = vrot.lane.b32.xlu0 %v1950, 92
      %v1960 = vpop.permute.xlu0 %1959
      %1961 = vrot.lane.b32.xlu0 %v1951, 92
      %v1962 = vpop.permute.xlu0 %1961
      %v1963 = vsel %vm898, %v1958, %v1960
      %v1964 = vsel %vm898, %v1960, %v1962
      %v1966 = vsel %vm1288, %v1953, 0
      %v1969 = vsel %vm1292, %v1963, 0
      %v1972 = vsel %vm1292, %v1964, 0
      %v1975 = vsel %vm1292, %v1962, 0
      %1977 = vmatprep.subr.bf16.mxu0 %v1972
      %1978 = vmatpush1.bf16.msra.mxu0 %v1969
      %1979 = vmatprep.subr.bf16.mxu0 0
      %1980 = vmatpush1.bf16.msra.mxu0 0
      %1981 = vmatprep.subr.bf16.mxu0 0
      %1982 = vmatpush1.bf16.msra.mxu0 0
      %1983 = vmatprep.subr.bf16.mxu0 0
      %1984 = vmatpush1.bf16.msra.mxu0 0
      %1985 = vmatprep.subr.bf16.mxu0 0
      %1986 = vmatpush1.bf16.msra.mxu0 0
      %1987 = vmatprep.subr.bf16.mxu0 0
      %1988 = vmatpush1.bf16.msra.mxu0 0
      %1989 = vmatprep.subr.bf16.mxu0 0
      %1990 = vmatpush1.bf16.msra.mxu0 0
      %1991 = vmatprep.subr.bf16.mxu0 0
      %1992 = vmatpush1.bf16.msra.mxu0 0
      %1993 = vmatprep.subr.bf16.mxu0 0
      %1994 = vmatpush1.bf16.msra.mxu0 0
      %1995 = vmatprep.subr.bf16.mxu0 0
      %1996 = vmatpush1.bf16.msra.mxu0 0
      %1997 = vmatprep.subr.bf16.mxu0 0
      %1998 = vmatpush1.bf16.msra.mxu0 0
      %1999 = vmatprep.subr.bf16.mxu0 0
      %2000 = vmatpush1.bf16.msra.mxu0 0
      %2001 = vmatprep.subr.bf16.mxu0 0
      %2002 = vmatpush1.bf16.msra.mxu0 0
      %2003 = vmatprep.subr.bf16.mxu0 0
      %2004 = vmatpush1.bf16.msra.mxu0 0
      %2005 = vmatprep.subr.bf16.mxu0 0
      %2006 = vmatpush1.bf16.msra.mxu0 0
      %2007 = vmatprep.subr.bf16.mxu0 0
      %2008 = vmatpush1.bf16.msra.mxu0 0
      %2009 = vmatprep.mubr.bf16.mxu0 0
      %2010 = vmatmul.mubr.bf16.gmra.mrb[0].mxu0 %v1966
      %v2011 = vpop.f32.mrb[0].mxu0
      %v2012 = vadd.f32 0.0, %v2011
      %v2013 = vpop.f32.mrb[0].mxu0
      %v2014 = vadd.f32 0.0, %v2013
      %v2015 = vpop.f32.mrb[0].mxu0
      %v2016 = vpop.f32.mrb[0].mxu0
      %2017 = vdwg.mxu0
      %2018 = vmatprep.subr.bf16.mxu0 0
      %2019 = vmatpush1.bf16.msra.mxu0 %v1975
      %2020 = vmatprep.subr.bf16.mxu0 0
      %2021 = vmatpush1.bf16.msra.mxu0 0
      %2022 = vmatprep.subr.bf16.mxu0 0
      %2023 = vmatpush1.bf16.msra.mxu0 0
      %2024 = vmatprep.subr.bf16.mxu0 0
      %2025 = vmatpush1.bf16.msra.mxu0 0
      %2026 = vmatprep.subr.bf16.mxu0 0
      %2027 = vmatpush1.bf16.msra.mxu0 0
      %2028 = vmatprep.subr.bf16.mxu0 0
      %2029 = vmatpush1.bf16.msra.mxu0 0
      %2030 = vmatprep.subr.bf16.mxu0 0
      %2031 = vmatpush1.bf16.msra.mxu0 0
      %2032 = vmatprep.subr.bf16.mxu0 0
      %2033 = vmatpush1.bf16.msra.mxu0 0
      %2034 = vmatprep.subr.bf16.mxu0 0
      %2035 = vmatpush1.bf16.msra.mxu0 0
      %2036 = vmatprep.subr.bf16.mxu0 0
      %2037 = vmatpush1.bf16.msra.mxu0 0
      %2038 = vmatprep.subr.bf16.mxu0 0
      %2039 = vmatpush1.bf16.msra.mxu0 0
      %2040 = vmatprep.subr.bf16.mxu0 0
      %2041 = vmatpush1.bf16.msra.mxu0 0
      %2042 = vmatprep.subr.bf16.mxu0 0
      %2043 = vmatpush1.bf16.msra.mxu0 0
      %2044 = vmatprep.subr.bf16.mxu0 0
      %2045 = vmatpush1.bf16.msra.mxu0 0
      %2046 = vmatprep.subr.bf16.mxu0 0
      %2047 = vmatpush1.bf16.msra.mxu0 0
      %2048 = vmatprep.subr.bf16.mxu0 0
      %2049 = vmatpush1.bf16.msra.mxu0 0
      %2050 = vmatprep.mubr.bf16.mxu0 0
      %2051 = vmatmul.mubr.bf16.gmra.mrb[0].mxu0 %v1966
      %v2052 = vpop.f32.mrb[0].mxu0
      %v2053 = vadd.f32 0.0, %v2052
      %v2054 = vpop.f32.mrb[0].mxu0
      %v2055 = vpop.f32.mrb[0].mxu0
      %v2056 = vpop.f32.mrb[0].mxu0
      %2057 = vdwg.mxu0
      %v2058 = vadd.f32 %v1941, %v2012
      %v2059 = vadd.f32 %v1942, %v2014
      %v2060 = vadd.f32 %v1943, %v2053
      %v2061 = vld [vmem:[#allocation2] sm:$0xff]
      %v2062 = vld [vmem:[#allocation2 + $0x8] sm:$0xf]
      %v2064 = vcombine.high %v2061, %v2061
      %v2066 = vpack.c.bf16 %v2061, %v2061
      %v2067 = vpack.c.bf16 %v2064, %v2064
      %v2068 = vpack.c.bf16 %v2062, %v2062
      %s2069 = scalar_lea.vmem %s4, 14
      %v2070 = vld [vmem:[%s2069] sm:$0x3]
      %2074 = vrot.lane.b32.xlu0 %v2066, 91
      %v2075 = vpop.permute.xlu0 %2074
      %2076 = vrot.lane.b32.xlu0 %v2067, 91
      %v2077 = vpop.permute.xlu0 %2076
      %2078 = vrot.lane.b32.xlu0 %v2068, 91
      %v2079 = vpop.permute.xlu0 %2078
      %v2080 = vsel %vm1005, %v2075, %v2077
      %v2081 = vsel %vm1005, %v2077, %v2079
      %v2083 = vsel %vm1288, %v2070, 0
      %v2086 = vsel %vm1292, %v2080, 0
      %v2089 = vsel %vm1292, %v2081, 0
      %v2092 = vsel %vm1292, %v2079, 0
      %2094 = vmatprep.subr.bf16.mxu0 %v2089
      %2095 = vmatpush1.bf16.msra.mxu0 %v2086
      %2096 = vmatprep.subr.bf16.mxu0 0
      %2097 = vmatpush1.bf16.msra.mxu0 0
      %2098 = vmatprep.subr.bf16.mxu0 0
      %2099 = vmatpush1.bf16.msra.mxu0 0
      %2100 = vmatprep.subr.bf16.mxu0 0
      %2101 = vmatpush1.bf16.msra.mxu0 0
      %2102 = vmatprep.subr.bf16.mxu0 0
      %2103 = vmatpush1.bf16.msra.mxu0 0
      %2104 = vmatprep.subr.bf16.mxu0 0
      %2105 = vmatpush1.bf16.msra.mxu0 0
      %2106 = vmatprep.subr.bf16.mxu0 0
      %2107 = vmatpush1.bf16.msra.mxu0 0
      %2108 = vmatprep.subr.bf16.mxu0 0
      %2109 = vmatpush1.bf16.msra.mxu0 0
      %2110 = vmatprep.subr.bf16.mxu0 0
      %2111 = vmatpush1.bf16.msra.mxu0 0
      %2112 = vmatprep.subr.bf16.mxu0 0
      %2113 = vmatpush1.bf16.msra.mxu0 0
      %2114 = vmatprep.subr.bf16.mxu0 0
      %2115 = vmatpush1.bf16.msra.mxu0 0
      %2116 = vmatprep.subr.bf16.mxu0 0
      %2117 = vmatpush1.bf16.msra.mxu0 0
      %2118 = vmatprep.subr.bf16.mxu0 0
      %2119 = vmatpush1.bf16.msra.mxu0 0
      %2120 = vmatprep.subr.bf16.mxu0 0
      %2121 = vmatpush1.bf16.msra.mxu0 0
      %2122 = vmatprep.subr.bf16.mxu0 0
      %2123 = vmatpush1.bf16.msra.mxu0 0
      %2124 = vmatprep.subr.bf16.mxu0 0
      %2125 = vmatpush1.bf16.msra.mxu0 0
      %2126 = vmatprep.mubr.bf16.mxu0 0
      %2127 = vmatmul.mubr.bf16.gmra.mrb[0].mxu0 %v2083
      %v2128 = vpop.f32.mrb[0].mxu0
      %v2129 = vadd.f32 0.0, %v2128
      %v2130 = vpop.f32.mrb[0].mxu0
      %v2131 = vadd.f32 0.0, %v2130
      %v2132 = vpop.f32.mrb[0].mxu0
      %v2133 = vpop.f32.mrb[0].mxu0
      %2134 = vdwg.mxu0
      %2135 = vmatprep.subr.bf16.mxu0 0
      %2136 = vmatpush1.bf16.msra.mxu0 %v2092
      %2137 = vmatprep.subr.bf16.mxu0 0
      %2138 = vmatpush1.bf16.msra.mxu0 0
      %2139 = vmatprep.subr.bf16.mxu0 0
      %2140 = vmatpush1.bf16.msra.mxu0 0
      %2141 = vmatprep.subr.bf16.mxu0 0
      %2142 = vmatpush1.bf16.msra.mxu0 0
      %2143 = vmatprep.subr.bf16.mxu0 0
      %2144 = vmatpush1.bf16.msra.mxu0 0
      %2145 = vmatprep.subr.bf16.mxu0 0
      %2146 = vmatpush1.bf16.msra.mxu0 0
      %2147 = vmatprep.subr.bf16.mxu0 0
      %2148 = vmatpush1.bf16.msra.mxu0 0
      %2149 = vmatprep.subr.bf16.mxu0 0
      %2150 = vmatpush1.bf16.msra.mxu0 0
      %2151 = vmatprep.subr.bf16.mxu0 0
      %2152 = vmatpush1.bf16.msra.mxu0 0
      %2153 = vmatprep.subr.bf16.mxu0 0
      %2154 = vmatpush1.bf16.msra.mxu0 0
      %2155 = vmatprep.subr.bf16.mxu0 0
      %2156 = vmatpush1.bf16.msra.mxu0 0
      %2157 = vmatprep.subr.bf16.mxu0 0
      %2158 = vmatpush1.bf16.msra.mxu0 0
      %2159 = vmatprep.subr.bf16.mxu0 0
      %2160 = vmatpush1.bf16.msra.mxu0 0
      %2161 = vmatprep.subr.bf16.mxu0 0
      %2162 = vmatpush1.bf16.msra.mxu0 0
      %2163 = vmatprep.subr.bf16.mxu0 0
      %2164 = vmatpush1.bf16.msra.mxu0 0
      %2165 = vmatprep.subr.bf16.mxu0 0
      %2166 = vmatpush1.bf16.msra.mxu0 0
      %2167 = vmatprep.mubr.bf16.mxu0 0
      %2168 = vmatmul.mubr.bf16.gmra.mrb[0].mxu0 %v2083
      %v2169 = vpop.f32.mrb[0].mxu0
      %v2170 = vadd.f32 0.0, %v2169
      %v2171 = vpop.f32.mrb[0].mxu0
      %v2172 = vpop.f32.mrb[0].mxu0
      %v2173 = vpop.f32.mrb[0].mxu0
      %2174 = vdwg.mxu0
      %v2175 = vadd.f32 %v2058, %v2129
      %v2176 = vadd.f32 %v2059, %v2131
      %v2177 = vadd.f32 %v2060, %v2170
      %v2178 = vld [vmem:[#allocation2] sm:$0xff]
      %v2179 = vld [vmem:[#allocation2 + $0x8] sm:$0xf]
      %v2181 = vcombine.high %v2178, %v2178
      %v2183 = vpack.c.bf16 %v2178, %v2178
      %v2184 = vpack.c.bf16 %v2181, %v2181
      %v2185 = vpack.c.bf16 %v2179, %v2179
      %s2186 = scalar_lea.vmem %s4, 16
      %v2187 = vld [vmem:[%s2186] sm:$0x3]
      %2191 = vrot.lane.b32.xlu0 %v2183, 90
      %v2192 = vpop.permute.xlu0 %2191
      %2193 = vrot.lane.b32.xlu0 %v2184, 90
      %v2194 = vpop.permute.xlu0 %2193
      %2195 = vrot.lane.b32.xlu0 %v2185, 90
      %v2196 = vpop.permute.xlu0 %2195
      %v2197 = vsel %vm1112, %v2192, %v2194
      %v2198 = vsel %vm1112, %v2194, %v2196
      %v2200 = vsel %vm1288, %v2187, 0
      %v2203 = vsel %vm1292, %v2197, 0
      %v2206 = vsel %vm1292, %v2198, 0
      %v2209 = vsel %vm1292, %v2196, 0
      %2211 = vmatprep.subr.bf16.mxu0 %v2206
      %2212 = vmatpush1.bf16.msra.mxu0 %v2203
      %2213 = vmatprep.subr.bf16.mxu0 0
      %2214 = vmatpush1.bf16.msra.mxu0 0
      %2215 = vmatprep.subr.bf16.mxu0 0
      %2216 = vmatpush1.bf16.msra.mxu0 0
      %2217 = vmatprep.subr.bf16.mxu0 0
      %2218 = vmatpush1.bf16.msra.mxu0 0
      %2219 = vmatprep.subr.bf16.mxu0 0
      %2220 = vmatpush1.bf16.msra.mxu0 0
      %2221 = vmatprep.subr.bf16.mxu0 0
      %2222 = vmatpush1.bf16.msra.mxu0 0
      %2223 = vmatprep.subr.bf16.mxu0 0
      %2224 = vmatpush1.bf16.msra.mxu0 0
      %2225 = vmatprep.subr.bf16.mxu0 0
      %2226 = vmatpush1.bf16.msra.mxu0 0
      %2227 = vmatprep.subr.bf16.mxu0 0
      %2228 = vmatpush1.bf16.msra.mxu0 0
      %2229 = vmatprep.subr.bf16.mxu0 0
      %2230 = vmatpush1.bf16.msra.mxu0 0
      %2231 = vmatprep.subr.bf16.mxu0 0
      %2232 = vmatpush1.bf16.msra.mxu0 0
      %2233 = vmatprep.subr.bf16.mxu0 0
      %2234 = vmatpush1.bf16.msra.mxu0 0
      %2235 = vmatprep.subr.bf16.mxu0 0
      %2236 = vmatpush1.bf16.msra.mxu0 0
      %2237 = vmatprep.subr.bf16.mxu0 0
      %2238 = vmatpush1.bf16.msra.mxu0 0
      %2239 = vmatprep.subr.bf16.mxu0 0
      %2240 = vmatpush1.bf16.msra.mxu0 0
      %2241 = vmatprep.subr.bf16.mxu0 0
      %2242 = vmatpush1.bf16.msra.mxu0 0
      %2243 = vmatprep.mubr.bf16.mxu0 0
      %2244 = vmatmul.mubr.bf16.gmra.mrb[0].mxu0 %v2200
      %v2245 = vpop.f32.mrb[0].mxu0
      %v2246 = vadd.f32 0.0, %v2245
      %v2247 = vpop.f32.mrb[0].mxu0
      %v2248 = vadd.f32 0.0, %v2247
      %v2249 = vpop.f32.mrb[0].mxu0
      %v2250 = vpop.f32.mrb[0].mxu0
      %2251 = vdwg.mxu0
      %2252 = vmatprep.subr.bf16.mxu0 0
      %2253 = vmatpush1.bf16.msra.mxu0 %v2209
      %2254 = vmatprep.subr.bf16.mxu0 0
      %2255 = vmatpush1.bf16.msra.mxu0 0
      %2256 = vmatprep.subr.bf16.mxu0 0
      %2257 = vmatpush1.bf16.msra.mxu0 0
      %2258 = vmatprep.subr.bf16.mxu0 0
      %2259 = vmatpush1.bf16.msra.mxu0 0
      %2260 = vmatprep.subr.bf16.mxu0 0
      %2261 = vmatpush1.bf16.msra.mxu0 0
      %2262 = vmatprep.subr.bf16.mxu0 0
      %2263 = vmatpush1.bf16.msra.mxu0 0
      %2264 = vmatprep.subr.bf16.mxu0 0
      %2265 = vmatpush1.bf16.msra.mxu0 0
      %2266 = vmatprep.subr.bf16.mxu0 0
      %2267 = vmatpush1.bf16.msra.mxu0 0
      %2268 = vmatprep.subr.bf16.mxu0 0
      %2269 = vmatpush1.bf16.msra.mxu0 0
      %2270 = vmatprep.subr.bf16.mxu0 0
      %2271 = vmatpush1.bf16.msra.mxu0 0
      %2272 = vmatprep.subr.bf16.mxu0 0
      %2273 = vmatpush1.bf16.msra.mxu0 0
      %2274 = vmatprep.subr.bf16.mxu0 0
      %2275 = vmatpush1.bf16.msra.mxu0 0
      %2276 = vmatprep.subr.bf16.mxu0 0
      %2277 = vmatpush1.bf16.msra.mxu0 0
      %2278 = vmatprep.subr.bf16.mxu0 0
      %2279 = vmatpush1.bf16.msra.mxu0 0
      %2280 = vmatprep.subr.bf16.mxu0 0
      %2281 = vmatpush1.bf16.msra.mxu0 0
      %2282 = vmatprep.subr.bf16.mxu0 0
      %2283 = vmatpush1.bf16.msra.mxu0 0
      %2284 = vmatprep.mubr.bf16.mxu0 0
      %2285 = vmatmul.mubr.bf16.gmra.mrb[0].mxu0 %v2200
      %v2286 = vpop.f32.mrb[0].mxu0
      %v2287 = vadd.f32 0.0, %v2286
      %v2288 = vpop.f32.mrb[0].mxu0
      %v2289 = vpop.f32.mrb[0].mxu0
      %v2290 = vpop.f32.mrb[0].mxu0
      %2291 = vdwg.mxu0
      %v2292 = vadd.f32 %v2175, %v2246
      %v2293 = vadd.f32 %v2176, %v2248
      %v2294 = vadd.f32 %v2177, %v2287
      %v2295 = vld [vmem:[%s5] sm:$0xf]
      %2297 = vset.pattern.permute.xlu0 0
      %2298 = vperm.xlu0 %2297, %v2295
      %v2299 = vpop.permute.xlu0 %2298
      %v2301 = vadd.f32 %v2292, %v2299
      %v2302 = vadd.f32 %v2293, %v2299
      %v2303 = vadd.f32 %v2294, %v2299
      %v2304 = vmax.f32 %v2301, 0.0
      %v2305 = vmax.f32 %v2302, 0.0
      %v2306 = vmax.f32 %v2303, 0.0
      %v2309 = vcombine.low %v2304, %v2305
      %2311 = vst [vmem:[%s251] sm:$0xff] %v2309
      %vm2312 = vcmask 551936
      %2313 = vst.msk [vmem:[%s251 + $0x8] sm:$0xf] %vm2312, %v2306
      %p2314 = scmp.lt.s32.totalorder %s17, 1
      %s2315 = scalar_select %p2314, %s17, 1
      %s2316 = smul.addr %s2315, 3
      %s2317 = smul.addr %s2316, 4
      %s2318 = scalar_lea.vmem %s6, %s2317
      // Predicated region
      $region45: #{unet_up_block_forward.3} parent=43 // pred_check
        %p2319 = pneg %p166
      $region46: #{unet_up_block_forward.3} parent=43 // pred_check_branch
        %2321 = sbr.rel (%p2319) target = $region48
      $region47: #{unet_up_block_forward.3} parent=43 // pred_region
        _
      $region48: #{unet_up_block_forward.3} parent=43 // pred_fallthru
        _
    $region44: #{unet_up_block_forward.3} parent=5 // pred_fallthru
      _
    %p2322 = scmp.le.s32.totalorder 2, %s12
    // Predicated region
    $region49: #{unet_up_block_forward.3} parent=5 // pred_check
      %p2323 = pneg %p2322
    $region50: #{unet_up_block_forward.3} parent=5 // pred_check_branch
      %2325 = sbr.rel (%p2323) target = $region52
    $region51: #{unet_up_block_forward.3} parent=5 // pred_region
      %s2326 = ssub.s32 %s12, 2
      // Predicated region
      $region53: #{unet_up_block_forward.3} parent=51 // pred_check
        %p2327 = pneg %p172
      $region54: #{unet_up_block_forward.3} parent=51 // pred_check_branch
        %2329 = sbr.rel (%p2327) target = $region56
      $region55: #{unet_up_block_forward.3} parent=51 // pred_region
        %p2330 = scmp.lt.s32.totalorder %s18, 1
        %s2331 = scalar_select %p2330, %s18, 1
        %s2332 = smul.addr %s2331, 3
        %s2333 = smul.addr %s2332, 4
        %s2334 = scalar_lea.vmem %s6, %s2333
      $region56: #{unet_up_block_forward.3} parent=51 // pred_fallthru
        _
    $region52: #{unet_up_block_forward.3} parent=5 // pred_fallthru
      _
  $region6: #{unet_up_block_forward.3} parent=0 // loop_footer
    %s16 = sadd.s32 1, %s12
  $region7: #{unet_up_block_forward.3} parent=0 // loop_footer_branch
    %11 = sbr.rel target = $region3
  $region8: #{unet_up_block_forward.3} parent=0 // loop_exit
    _

</llo_original>
